<compile_context>
chip_gen: v6e
topology: v6e:2x2x1
jax: 0.10.0
libtpu: 0.0.40
codegen_flags: <defaults>
</compile_context>

<pallas_src>
import jax
import jax.numpy as jnp
from jax.experimental import pallas as pl
from jax.experimental.pallas import tpu as pltpu


def qmodel_kernel(x_ref, wx_ref, bpe_ref, w0p_ref, b0_ref,
                  w1_ref, b1_ref, w2_ref, b2_ref, out_ref):
    """One batch tile: x_ref [TB, D] -> out_ref [TB, nn_out] f32."""
    x_bf = x_ref[...].astype(jnp.bfloat16)       # no-op if x is already bf16
    w0w = w0p_ref.shape[1]                       # static width of share[0]

    # Fused x matmul: t = x @ [w0x | wpe_ext]  ->  [TB, w0 + P]
    t = jnp.dot(x_bf, wx_ref[...], preferred_element_type=jnp.float32)

    # product encoder: ReLU(x-projection + bpe)   (columns w0 : w0+P of t)
    p_e = jnp.maximum(t[:, w0w:] + bpe_ref[...], 0.0)

    # share[0]: ReLU(p_e @ W0p + x @ W0x + b0); x @ W0x is t[:, :w0] (lane offset 0)
    h = jnp.dot(p_e.astype(jnp.bfloat16), w0p_ref[...],
                preferred_element_type=jnp.float32) + t[:, :w0w]
    h = jnp.maximum(h + b0_ref[...], 0.0)

    # share[1]: ReLU(h @ W1 + b1)
    h = jnp.dot(h.astype(jnp.bfloat16), w1_ref[...],
                preferred_element_type=jnp.float32)
    h = jnp.maximum(h + b1_ref[...], 0.0)

    # share[2] (output): ReLU(h @ W2 + b2)
    h = jnp.dot(h.astype(jnp.bfloat16), w2_ref[...],
                preferred_element_type=jnp.float32)
    h = jnp.maximum(h + b2_ref[...], 0.0)

    # TODO(synk): at very large B, emit a lane-dense packed output
    # ([TB*nn_out/128, 128]) and reshape in the wrapper to avoid the masked
    # vst on an 8-wide store; only worth it once the output write is the
    # exposed cost (sub-microsecond at B=512).
    out_ref[...] = h.astype(out_ref.dtype)


def _tensorcores_per_device():
    """Best-effort count of TensorCores a 'parallel' grid axis is sharded over.

    v4 / v5p (megacore) and v7x expose 2 TCs behind one device; v5e / v6e
    expose 1.  Falls back to 1 (only a perf, never a correctness, decision).
    """
    try:
        kind = jax.devices()[0].device_kind.lower()
    except Exception:
        return 1
    if "v7" in kind or "v5p" in kind or "v4" in kind:
        return 2
    return 1


def _pick_batch_tile(B, block_b, n_cores):
    """Pick (tile_rows, pad_rows) for the batch axis.

    Preference order:
      1. tile divides B exactly (no jnp.pad copy of x), tile % 8 == 0,
         tile <= block_b, and the tile count is a multiple of n_cores
         (feeds both TensorCores on v7x / megacore).
      2. same but ignoring the core-count alignment.
      3. a single full-extent tile (B <= block_b)  -- still no pad.
      4. last resort: pad the ragged tail to a multiple of 8.
    """
    tb_cap = min(block_b, B)
    fallback = None
    for tb in range(tb_cap - tb_cap % 8, 7, -8):      # multiples of 8, descending
        if B % tb:
            continue
        if (B // tb) % n_cores == 0:
            return tb, 0
        if fallback is None:
            fallback = tb
    if fallback is not None:
        return fallback, 0
    if B <= block_b:
        return B, 0                                    # full-extent block, no pad
    tb = max(8, (block_b // 8) * 8)
    return tb, (-B) % tb


def qmodel_forward(x, kparams, *, block_b=2048):
    """x: [B, 2P + C] (f32 or bf16) -> [B, nn_out] float32."""
    B, D = x.shape
    nn_out = kparams["b2"].shape[-1]
    w0w = kparams["w0p"].shape[-1]
    p_width = kparams["bpe"].shape[-1]

    tb, pad = _pick_batch_tile(B, block_b, _tensorcores_per_device())
    # jnp.pad (an extra HBM read+write of x) only happens on the rare ragged
    # last-resort path; the tile picker prefers exact divisors of B.
    x_p = jnp.pad(x, ((0, pad), (0, 0))) if pad else x
    bp = x_p.shape[0]
    grid = (bp // tb,)

    weights = (kparams["wx"], kparams["bpe"],
               kparams["w0p"], kparams["b0"],
               kparams["w1"], kparams["b1"],
               kparams["w2"], kparams["b2"])

    in_specs = [pl.BlockSpec((tb, D), lambda i: (i, 0))]
    # Weights/biases: one full block with a constant index_map -> fetched once,
    # VMEM-resident across grid steps (no re-DMA).
    in_specs += [pl.BlockSpec(w.shape, lambda i: (0, 0)) for w in weights]
    out_spec = pl.BlockSpec((tb, nn_out), lambda i: (i, 0))

    # Advisory cost hint so XLA schedules/overlaps this call inside a larger jit.
    w1w = kparams["w2"].shape[0]
    flops = 2 * bp * (D * (w0w + p_width) + p_width * w0w
                      + w0w * w1w + w1w * nn_out)
    weight_bytes = sum(int(w.size) * w.dtype.itemsize for w in weights)
    bytes_accessed = (bp * D * x.dtype.itemsize + weight_bytes
                      + bp * nn_out * 4)
    cost = pl.CostEstimate(flops=flops, transcendentals=0,
                           bytes_accessed=bytes_accessed)

    out = pl.pallas_call(
        qmodel_kernel,
        out_shape=jax.ShapeDtypeStruct((bp, nn_out), jnp.float32),
        grid=grid,
        in_specs=in_specs,
        out_specs=out_spec,
        compiler_params=pltpu.CompilerParams(
            dimension_semantics=("parallel",)),
        cost_estimate=cost,
    )(x_p, *weights)
    return out[:B] if bp != B else out


def make_params(key, num_products, num_cus_types, widths, nn_out):
    """Synthetic params with the PyTorch module's shapes / init scheme.

    Weights ~ U(-0.1, 0.1), rounded to bf16-representable values so the bf16
    kernel weights and the f32 reference use identical values; biases = 0.1.
    """
    P, C = num_products, num_cus_types
    w0w, w1w = widths
    ks = jax.random.split(key, 4)

    def uni(k, shape):
        w = jax.random.uniform(k, shape, jnp.float32, minval=-0.1, maxval=0.1)
        return w.astype(jnp.bfloat16).astype(jnp.float32)

    return {
        "wpe": uni(ks[0], (2 * P, P)),           # product_encoder Linear(2P -> P)
        "bpe": jnp.full((1, P), 0.1, jnp.float32),
        "w0": uni(ks[1], (P + C, w0w)),          # share[0] Linear(P+C -> w0)
        "b0": jnp.full((1, w0w), 0.1, jnp.float32),
        "w1": uni(ks[2], (w0w, w1w)),            # share[1] Linear(w0 -> w1)
        "b1": jnp.full((1, w1w), 0.1, jnp.float32),
        "w2": uni(ks[3], (w1w, nn_out)),         # share[out] Linear(w1 -> nn_out)
        "b2": jnp.full((1, nn_out), 0.1, jnp.float32),
    }


def prepare_kernel_params(params, num_products, num_cus_types):
    """Fold the forward's slicing/concat into zero-padded weight rows, fuse the
    two x-consuming projections into one weight matrix, and cast the static
    weights to bf16.  Run once, outside the hot path."""
    P, C = num_products, num_cus_types
    D = 2 * P + C
    w0w = params["w0"].shape[1]

    # product_encoder weight rows placed at the x positions they multiply
    # (zero rows for the customer-type segment x[:, P:P+C]).
    wpe_ext = jnp.zeros((D, P), jnp.float32)
    wpe_ext = wpe_ext.at[:P, :].set(params["wpe"][:P, :])       # x[:, :P]
    wpe_ext = wpe_ext.at[P + C:, :].set(params["wpe"][P:, :])   # x[:, P+C:]

    # c_e rows of share[0] placed at their x positions (zero elsewhere).
    w0x = jnp.zeros((D, w0w), jnp.float32)
    w0x = w0x.at[P:P + C, :].set(params["w0"][P:, :])

    # Fused x weight: x @ W_x == [x @ w0x | x @ wpe_ext]   (single MXU matmul)
    wx = jnp.concatenate([w0x, wpe_ext], axis=1)                # [D, w0 + P]

    return {
        "wx": wx.astype(jnp.bfloat16),
        "bpe": params["bpe"],
        "w0p": params["w0"][:P, :].astype(jnp.bfloat16),        # p_e rows
        "b0": params["b0"],
        "w1": params["w1"].astype(jnp.bfloat16),
        "b1": params["b1"],
        "w2": params["w2"].astype(jnp.bfloat16),
        "b2": params["b2"],
    }


def qmodel_reference(x, params, num_products, num_cus_types):
    """Pure-JAX f32 reference of the original PyTorch forward."""
    P, C = num_products, num_cus_types
    pe_in = jnp.concatenate([x[:, :P], x[:, P + C:]], axis=1)
    c_e = x[:, P:P + C]
    p_e = jnp.maximum(pe_in @ params["wpe"] + params["bpe"], 0.0)
    h = jnp.concatenate([p_e, c_e], axis=1)
    h = jnp.maximum(h @ params["w0"] + params["b0"], 0.0)
    h = jnp.maximum(h @ params["w1"] + params["b1"], 0.0)
    h = jnp.maximum(h @ params["w2"] + params["b2"], 0.0)      # final ReLU is in
    return h                                                    # the module's share


if __name__ == "__main__":
    # Shapes consistent with the module: num_products=8, num_cus_types=4,
    # h=2, w=[32, 32], nn_out=8.  B=512 exercises the tile picker (one
    # full-batch tile on 1-TC chips, two 256-row tiles on 2-TC chips).
    B = 512
    P = 8          # num_products
    C = 4          # num_cus_types
    WIDTHS = (32, 32)
    NN_OUT = 8

    key = jax.random.PRNGKey(0)
    kx, kp = jax.random.split(key)
    x = jax.random.normal(kx, (B, 2 * P + C), dtype=jnp.float32)

    params = make_params(kp, P, C, WIDTHS, NN_OUT)
    kparams = prepare_kernel_params(params, P, C)

    out = qmodel_forward(x, kparams)
    out = jax.block_until_ready(out)

    ref = qmodel_reference(x, params, P, C)
    assert out.shape == (B, NN_OUT)
    # bf16 matmul operands (f32 accumulation) vs pure-f32 reference.
    assert bool(jnp.allclose(out, ref, atol=2e-2, rtol=2e-2)), \
        float(jnp.max(jnp.abs(out - ref)))

    print("KERNEL_OK")
</pallas_src>

<mosaic_0001>
module attributes {stable_mosaic.version = 11 : i64} {
  func.func @qmodel_kernel(%arg0: i32, %arg1: memref<512x20xf32, #tpu.memory_space<vmem>>, %arg2: memref<20x40xbf16, #tpu.memory_space<vmem>>, %arg3: memref<1x8xf32, #tpu.memory_space<vmem>>, %arg4: memref<8x32xbf16, #tpu.memory_space<vmem>>, %arg5: memref<1x32xf32, #tpu.memory_space<vmem>>, %arg6: memref<32x32xbf16, #tpu.memory_space<vmem>>, %arg7: memref<1x32xf32, #tpu.memory_space<vmem>>, %arg8: memref<32x8xbf16, #tpu.memory_space<vmem>>, %arg9: memref<1x8xf32, #tpu.memory_space<vmem>>, %arg10: memref<512x8xf32, #tpu.memory_space<vmem>>) attributes {dimension_semantics = [#tpu.dimension_semantics<parallel>], iteration_bounds = array<i64: 1>, scalar_prefetch = 0 : i64, scratch_operands = 0 : i64, tpu.core_type = #tpu.core_type<tc>, window_params = [{transform_indices = @transform_0, window_bounds = array<i64: 512, 20>}, {pipeline_mode = #tpu.pipeline_mode<synchronous>, transform_indices = @transform_1, window_bounds = array<i64: 20, 40>}, {pipeline_mode = #tpu.pipeline_mode<synchronous>, transform_indices = @transform_2, window_bounds = array<i64: 1, 8>}, {pipeline_mode = #tpu.pipeline_mode<synchronous>, transform_indices = @transform_3, window_bounds = array<i64: 8, 32>}, {pipeline_mode = #tpu.pipeline_mode<synchronous>, transform_indices = @transform_4, window_bounds = array<i64: 1, 32>}, {pipeline_mode = #tpu.pipeline_mode<synchronous>, transform_indices = @transform_5, window_bounds = array<i64: 32, 32>}, {pipeline_mode = #tpu.pipeline_mode<synchronous>, transform_indices = @transform_6, window_bounds = array<i64: 1, 32>}, {pipeline_mode = #tpu.pipeline_mode<synchronous>, transform_indices = @transform_7, window_bounds = array<i64: 32, 8>}, {pipeline_mode = #tpu.pipeline_mode<synchronous>, transform_indices = @transform_8, window_bounds = array<i64: 1, 8>}, {transform_indices = @transform_9, window_bounds = array<i64: 512, 8>}]} {
    %c0 = arith.constant 0 : index
    %c0_0 = arith.constant 0 : index
    %0 = vector.load %arg1[%c0, %c0_0] : memref<512x20xf32, #tpu.memory_space<vmem>>, vector<512x20xf32>
    %1 = arith.truncf %0 : vector<512x20xf32> to vector<512x20xbf16>
    %c0_1 = arith.constant 0 : index
    %c0_2 = arith.constant 0 : index
    %2 = vector.load %arg2[%c0_1, %c0_2] : memref<20x40xbf16, #tpu.memory_space<vmem>>, vector<20x40xbf16>
    %cst = arith.constant dense<0.000000e+00> : vector<512x40xf32>
    %3 = tpu.matmul %1, %2, %cst {dimension_numbers = #tpu.dot_dimension_numbers<[1], [0], [0], [1], [0, 0, 1, 1], [], []>} : vector<512x20xbf16>, vector<20x40xbf16>, vector<512x40xf32> -> vector<512x40xf32>
    %4 = vector.extract_strided_slice %3 {offsets = [0, 32], sizes = [512, 8], strides = [1, 1]} : vector<512x40xf32> to vector<512x8xf32>
    %c0_3 = arith.constant 0 : index
    %c0_4 = arith.constant 0 : index
    %5 = vector.load %arg3[%c0_3, %c0_4] : memref<1x8xf32, #tpu.memory_space<vmem>>, vector<1x8xf32>
    %6 = vector.broadcast %5 : vector<1x8xf32> to vector<512x8xf32>
    %7 = arith.addf %4, %6 : vector<512x8xf32>
    %cst_5 = arith.constant 0.000000e+00 : f32
    %8 = vector.broadcast %cst_5 : f32 to vector<512x8xf32>
    %9 = arith.maximumf %7, %8 : vector<512x8xf32>
    %10 = arith.truncf %9 : vector<512x8xf32> to vector<512x8xbf16>
    %c0_6 = arith.constant 0 : index
    %c0_7 = arith.constant 0 : index
    %11 = vector.load %arg4[%c0_6, %c0_7] : memref<8x32xbf16, #tpu.memory_space<vmem>>, vector<8x32xbf16>
    %cst_8 = arith.constant dense<0.000000e+00> : vector<512x32xf32>
    %12 = tpu.matmul %10, %11, %cst_8 {dimension_numbers = #tpu.dot_dimension_numbers<[1], [0], [0], [1], [0, 0, 1, 1], [], []>} : vector<512x8xbf16>, vector<8x32xbf16>, vector<512x32xf32> -> vector<512x32xf32>
    %13 = vector.extract_strided_slice %3 {offsets = [0, 0], sizes = [512, 32], strides = [1, 1]} : vector<512x40xf32> to vector<512x32xf32>
    %14 = arith.addf %12, %13 : vector<512x32xf32>
    %c0_9 = arith.constant 0 : index
    %c0_10 = arith.constant 0 : index
    %15 = vector.load %arg5[%c0_9, %c0_10] : memref<1x32xf32, #tpu.memory_space<vmem>>, vector<1x32xf32>
    %16 = vector.broadcast %15 : vector<1x32xf32> to vector<512x32xf32>
    %17 = arith.addf %14, %16 : vector<512x32xf32>
    %cst_11 = arith.constant 0.000000e+00 : f32
    %18 = vector.broadcast %cst_11 : f32 to vector<512x32xf32>
    %19 = arith.maximumf %17, %18 : vector<512x32xf32>
    %20 = arith.truncf %19 : vector<512x32xf32> to vector<512x32xbf16>
    %c0_12 = arith.constant 0 : index
    %c0_13 = arith.constant 0 : index
    %21 = vector.load %arg6[%c0_12, %c0_13] : memref<32x32xbf16, #tpu.memory_space<vmem>>, vector<32x32xbf16>
    %cst_14 = arith.constant dense<0.000000e+00> : vector<512x32xf32>
    %22 = tpu.matmul %20, %21, %cst_14 {dimension_numbers = #tpu.dot_dimension_numbers<[1], [0], [0], [1], [0, 0, 1, 1], [], []>} : vector<512x32xbf16>, vector<32x32xbf16>, vector<512x32xf32> -> vector<512x32xf32>
    %c0_15 = arith.constant 0 : index
    %c0_16 = arith.constant 0 : index
    %23 = vector.load %arg7[%c0_15, %c0_16] : memref<1x32xf32, #tpu.memory_space<vmem>>, vector<1x32xf32>
    %24 = vector.broadcast %23 : vector<1x32xf32> to vector<512x32xf32>
    %25 = arith.addf %22, %24 : vector<512x32xf32>
    %cst_17 = arith.constant 0.000000e+00 : f32
    %26 = vector.broadcast %cst_17 : f32 to vector<512x32xf32>
    %27 = arith.maximumf %25, %26 : vector<512x32xf32>
    %28 = arith.truncf %27 : vector<512x32xf32> to vector<512x32xbf16>
    %c0_18 = arith.constant 0 : index
    %c0_19 = arith.constant 0 : index
    %29 = vector.load %arg8[%c0_18, %c0_19] : memref<32x8xbf16, #tpu.memory_space<vmem>>, vector<32x8xbf16>
    %cst_20 = arith.constant dense<0.000000e+00> : vector<512x8xf32>
    %30 = tpu.matmul %28, %29, %cst_20 {dimension_numbers = #tpu.dot_dimension_numbers<[1], [0], [0], [1], [0, 0, 1, 1], [], []>} : vector<512x32xbf16>, vector<32x8xbf16>, vector<512x8xf32> -> vector<512x8xf32>
    %c0_21 = arith.constant 0 : index
    %c0_22 = arith.constant 0 : index
    %31 = vector.load %arg9[%c0_21, %c0_22] : memref<1x8xf32, #tpu.memory_space<vmem>>, vector<1x8xf32>
    %32 = vector.broadcast %31 : vector<1x8xf32> to vector<512x8xf32>
    %33 = arith.addf %30, %32 : vector<512x8xf32>
    %cst_23 = arith.constant 0.000000e+00 : f32
    %34 = vector.broadcast %cst_23 : f32 to vector<512x8xf32>
    %35 = arith.maximumf %33, %34 : vector<512x8xf32>
    %c0_24 = arith.constant 0 : index
    %c0_25 = arith.constant 0 : index
    %36 = vector.load %arg10[%c0_24, %c0_25] : memref<512x8xf32, #tpu.memory_space<vmem>>, vector<512x8xf32>
    tpu.vector_store %arg10[%c0_24, %c0_25], %35 {strides = array<i32>} : memref<512x8xf32, #tpu.memory_space<vmem>>, vector<512x8xf32>,
    return
  }
  func.func @transform_0(%arg0: i32) -> (i32, i32) {
    %c0_i32 = arith.constant 0 : i32
    %c0_i32_0 = arith.constant 0 : i32
    return %arg0, %c0_i32 : i32, i32
  }
  func.func @transform_1(%arg0: i32) -> (i32, i32) {
    %c0_i32 = arith.constant 0 : i32
    %c0_i32_0 = arith.constant 0 : i32
    %c0_i32_1 = arith.constant 0 : i32
    return %c0_i32, %c0_i32_0 : i32, i32
  }
  func.func @transform_2(%arg0: i32) -> (i32, i32) {
    %c0_i32 = arith.constant 0 : i32
    %c0_i32_0 = arith.constant 0 : i32
    %c0_i32_1 = arith.constant 0 : i32
    return %c0_i32, %c0_i32_0 : i32, i32
  }
  func.func @transform_3(%arg0: i32) -> (i32, i32) {
    %c0_i32 = arith.constant 0 : i32
    %c0_i32_0 = arith.constant 0 : i32
    %c0_i32_1 = arith.constant 0 : i32
    return %c0_i32, %c0_i32_0 : i32, i32
  }
  func.func @transform_4(%arg0: i32) -> (i32, i32) {
    %c0_i32 = arith.constant 0 : i32
    %c0_i32_0 = arith.constant 0 : i32
    %c0_i32_1 = arith.constant 0 : i32
    return %c0_i32, %c0_i32_0 : i32, i32
  }
  func.func @transform_5(%arg0: i32) -> (i32, i32) {
    %c0_i32 = arith.constant 0 : i32
    %c0_i32_0 = arith.constant 0 : i32
    %c0_i32_1 = arith.constant 0 : i32
    return %c0_i32, %c0_i32_0 : i32, i32
  }
  func.func @transform_6(%arg0: i32) -> (i32, i32) {
    %c0_i32 = arith.constant 0 : i32
    %c0_i32_0 = arith.constant 0 : i32
    %c0_i32_1 = arith.constant 0 : i32
    return %c0_i32, %c0_i32_0 : i32, i32
  }
  func.func @transform_7(%arg0: i32) -> (i32, i32) {
    %c0_i32 = arith.constant 0 : i32
    %c0_i32_0 = arith.constant 0 : i32
    %c0_i32_1 = arith.constant 0 : i32
    return %c0_i32, %c0_i32_0 : i32, i32
  }
  func.func @transform_8(%arg0: i32) -> (i32, i32) {
    %c0_i32 = arith.constant 0 : i32
    %c0_i32_0 = arith.constant 0 : i32
    %c0_i32_1 = arith.constant 0 : i32
    return %c0_i32, %c0_i32_0 : i32, i32
  }
  func.func @transform_9(%arg0: i32) -> (i32, i32) {
    %c0_i32 = arith.constant 0 : i32
    %c0_i32_0 = arith.constant 0 : i32
    return %arg0, %c0_i32 : i32, i32
  }
}

</mosaic_0001>

<llo_original>
// kernel: tpu_custom_call.1
$region0: #{tpu_custom_call.1}
  #allocation0 [shape = 'u32[]', space=smem, size = 0x4, offset = 0x4, fixed_abs, tag = 'smem constant byte address 0x4 - core index']
  #allocation1 [shape = 'u32[144,128]{1,0:T(1,128)}', space=vmem, size = 0x12000, scoped, tag = 'internal scratch']
  %s0 = inlined_call_operand.vmem [shape: f32[512,20], index: 0, kind: input, shape index: {}]
  %s1 = inlined_call_operand.vmem [shape: bf16[20,40], index: 1, kind: input, shape index: {}]
  %s2 = inlined_call_operand.vmem [shape: f32[1,8], index: 2, kind: input, shape index: {}]
  %s3 = inlined_call_operand.vmem [shape: bf16[8,32], index: 3, kind: input, shape index: {}]
  %s4 = inlined_call_operand.vmem [shape: f32[1,32], index: 4, kind: input, shape index: {}]
  %s5 = inlined_call_operand.vmem [shape: bf16[32,32], index: 5, kind: input, shape index: {}]
  %s6 = inlined_call_operand.vmem [shape: f32[1,32], index: 6, kind: input, shape index: {}]
  %s7 = inlined_call_operand.vmem [shape: bf16[32,8], index: 7, kind: input, shape index: {}]
  %s8 = inlined_call_operand.vmem [shape: f32[1,8], index: 8, kind: input, shape index: {}]
  %s9 = inlined_call_operand.vmem [shape: f32[512,8], index: 9, kind: output, shape index: {}]
  %s10 = sld [smem:[#allocation0]]
  $region46: #{tpu_custom_call.1} parent=0
    _
  %s12 = ssub.s32 1, %s10
  %s13 = scalar_select 0, %s12, %s10
  // Predicated region
  $region2: #{tpu_custom_call.1} parent=0 // pred_check
    _
  $region3: #{tpu_custom_call.1} parent=0 // pred_check_branch
    %15 = sbr.rel (0) target = $region5
  $region4: #{tpu_custom_call.1} parent=0 // pred_region
    _
  $region5: #{tpu_custom_call.1} parent=0 // pred_fallthru
    _
  // Predicated region
  $region6: #{tpu_custom_call.1} parent=0 // pred_check
    _
  $region7: #{tpu_custom_call.1} parent=0 // pred_check_branch
    %17 = sbr.rel (0) target = $region9
  $region8: #{tpu_custom_call.1} parent=0 // pred_region
    _
  $region9: #{tpu_custom_call.1} parent=0 // pred_fallthru
    _
  // Predicated region
  $region10: #{tpu_custom_call.1} parent=0 // pred_check
    _
  $region11: #{tpu_custom_call.1} parent=0 // pred_check_branch
    %19 = sbr.rel (0) target = $region13
  $region12: #{tpu_custom_call.1} parent=0 // pred_region
    _
  $region13: #{tpu_custom_call.1} parent=0 // pred_fallthru
    _
  // Predicated region
  $region14: #{tpu_custom_call.1} parent=0 // pred_check
    _
  $region15: #{tpu_custom_call.1} parent=0 // pred_check_branch
    %21 = sbr.rel (0) target = $region17
  $region16: #{tpu_custom_call.1} parent=0 // pred_region
    _
  $region17: #{tpu_custom_call.1} parent=0 // pred_fallthru
    _
  // Predicated region
  $region18: #{tpu_custom_call.1} parent=0 // pred_check
    _
  $region19: #{tpu_custom_call.1} parent=0 // pred_check_branch
    %23 = sbr.rel (0) target = $region21
  $region20: #{tpu_custom_call.1} parent=0 // pred_region
    _
  $region21: #{tpu_custom_call.1} parent=0 // pred_fallthru
    _
  // Predicated region
  $region22: #{tpu_custom_call.1} parent=0 // pred_check
    _
  $region23: #{tpu_custom_call.1} parent=0 // pred_check_branch
    %25 = sbr.rel (0) target = $region25
  $region24: #{tpu_custom_call.1} parent=0 // pred_region
    _
  $region25: #{tpu_custom_call.1} parent=0 // pred_fallthru
    _
  // Predicated region
  $region26: #{tpu_custom_call.1} parent=0 // pred_check
    _
  $region27: #{tpu_custom_call.1} parent=0 // pred_check_branch
    %27 = sbr.rel (0) target = $region29
  $region28: #{tpu_custom_call.1} parent=0 // pred_region
    _
  $region29: #{tpu_custom_call.1} parent=0 // pred_fallthru
    _
  // Predicated region
  $region30: #{tpu_custom_call.1} parent=0 // pred_check
    _
  $region31: #{tpu_custom_call.1} parent=0 // pred_check_branch
    %29 = sbr.rel (0) target = $region33
  $region32: #{tpu_custom_call.1} parent=0 // pred_region
    _
  $region33: #{tpu_custom_call.1} parent=0 // pred_fallthru
    _
  // Predicated region
  $region34: #{tpu_custom_call.1} parent=0 // pred_check
    _
  $region35: #{tpu_custom_call.1} parent=0 // pred_check_branch
    %31 = sbr.rel (0) target = $region37
  $region36: #{tpu_custom_call.1} parent=0 // pred_region
    _
  $region37: #{tpu_custom_call.1} parent=0 // pred_fallthru
    _
  %v33 = vld [vmem:[%s0] sm:$0xff]
  %v34 = vld [vmem:[%s0 + $0x8] sm:$0xff]
  %v35 = vld [vmem:[%s0 + $0x10] sm:$0xff]
  %v36 = vld [vmem:[%s0 + $0x18] sm:$0xff]
  %v37 = vld [vmem:[%s0 + $0x20] sm:$0xff]
  %v38 = vld [vmem:[%s0 + $0x28] sm:$0xff]
  %v39 = vld [vmem:[%s0 + $0x30] sm:$0xff]
  %v40 = vld [vmem:[%s0 + $0x38] sm:$0xff]
  %v41 = vld [vmem:[%s0 + $0x40] sm:$0xff]
  %v42 = vld [vmem:[%s0 + $0x48] sm:$0xff]
  %v43 = vld [vmem:[%s0 + $0x50] sm:$0xff]
  %v44 = vld [vmem:[%s0 + $0x58] sm:$0xff]
  %v45 = vld [vmem:[%s0 + $0x60] sm:$0xff]
  %v46 = vld [vmem:[%s0 + $0x68] sm:$0xff]
  %v47 = vld [vmem:[%s0 + $0x70] sm:$0xff]
  %v48 = vld [vmem:[%s0 + $0x78] sm:$0xff]
  %v49 = vld [vmem:[%s0 + $0x80] sm:$0xff]
  %v50 = vld [vmem:[%s0 + $0x88] sm:$0xff]
  %v51 = vld [vmem:[%s0 + $0x90] sm:$0xff]
  %v52 = vld [vmem:[%s0 + $0x98] sm:$0xff]
  %v53 = vld [vmem:[%s0 + $0xa0] sm:$0xff]
  %v54 = vld [vmem:[%s0 + $0xa8] sm:$0xff]
  %v55 = vld [vmem:[%s0 + $0xb0] sm:$0xff]
  %v56 = vld [vmem:[%s0 + $0xb8] sm:$0xff]
  %v57 = vld [vmem:[%s0 + $0xc0] sm:$0xff]
  %v58 = vld [vmem:[%s0 + $0xc8] sm:$0xff]
  %v59 = vld [vmem:[%s0 + $0xd0] sm:$0xff]
  %v60 = vld [vmem:[%s0 + $0xd8] sm:$0xff]
  %v61 = vld [vmem:[%s0 + $0xe0] sm:$0xff]
  %v62 = vld [vmem:[%s0 + $0xe8] sm:$0xff]
  %v63 = vld [vmem:[%s0 + $0xf0] sm:$0xff]
  %v64 = vld [vmem:[%s0 + $0xf8] sm:$0xff]
  %v65 = vld [vmem:[%s0 + $0x100] sm:$0xff]
  %v66 = vld [vmem:[%s0 + $0x108] sm:$0xff]
  %v67 = vld [vmem:[%s0 + $0x110] sm:$0xff]
  %v68 = vld [vmem:[%s0 + $0x118] sm:$0xff]
  %v69 = vld [vmem:[%s0 + $0x120] sm:$0xff]
  %v70 = vld [vmem:[%s0 + $0x128] sm:$0xff]
  %v71 = vld [vmem:[%s0 + $0x130] sm:$0xff]
  %v72 = vld [vmem:[%s0 + $0x138] sm:$0xff]
  %v73 = vld [vmem:[%s0 + $0x140] sm:$0xff]
  %v74 = vld [vmem:[%s0 + $0x148] sm:$0xff]
  %v75 = vld [vmem:[%s0 + $0x150] sm:$0xff]
  %v76 = vld [vmem:[%s0 + $0x158] sm:$0xff]
  %v77 = vld [vmem:[%s0 + $0x160] sm:$0xff]
  %v78 = vld [vmem:[%s0 + $0x168] sm:$0xff]
  %v79 = vld [vmem:[%s0 + $0x170] sm:$0xff]
  %v80 = vld [vmem:[%s0 + $0x178] sm:$0xff]
  %v81 = vld [vmem:[%s0 + $0x180] sm:$0xff]
  %v82 = vld [vmem:[%s0 + $0x188] sm:$0xff]
  %v83 = vld [vmem:[%s0 + $0x190] sm:$0xff]
  %v84 = vld [vmem:[%s0 + $0x198] sm:$0xff]
  %v85 = vld [vmem:[%s0 + $0x1a0] sm:$0xff]
  %v86 = vld [vmem:[%s0 + $0x1a8] sm:$0xff]
  %v87 = vld [vmem:[%s0 + $0x1b0] sm:$0xff]
  %v88 = vld [vmem:[%s0 + $0x1b8] sm:$0xff]
  %v89 = vld [vmem:[%s0 + $0x1c0] sm:$0xff]
  %v90 = vld [vmem:[%s0 + $0x1c8] sm:$0xff]
  %v91 = vld [vmem:[%s0 + $0x1d0] sm:$0xff]
  %v92 = vld [vmem:[%s0 + $0x1d8] sm:$0xff]
  %v93 = vld [vmem:[%s0 + $0x1e0] sm:$0xff]
  %v94 = vld [vmem:[%s0 + $0x1e8] sm:$0xff]
  %v95 = vld [vmem:[%s0 + $0x1f0] sm:$0xff]
  %v96 = vld [vmem:[%s0 + $0x1f8] sm:$0xff]
  %v97 = vpack.c.bf16 %v34, %v33
  %v98 = vpack.c.bf16 %v36, %v35
  %v99 = vpack.c.bf16 %v38, %v37
  %v100 = vpack.c.bf16 %v40, %v39
  %v101 = vpack.c.bf16 %v42, %v41
  %v102 = vpack.c.bf16 %v44, %v43
  %v103 = vpack.c.bf16 %v46, %v45
  %v104 = vpack.c.bf16 %v48, %v47
  %v105 = vpack.c.bf16 %v50, %v49
  %v106 = vpack.c.bf16 %v52, %v51
  %v107 = vpack.c.bf16 %v54, %v53
  %v108 = vpack.c.bf16 %v56, %v55
  %v109 = vpack.c.bf16 %v58, %v57
  %v110 = vpack.c.bf16 %v60, %v59
  %v111 = vpack.c.bf16 %v62, %v61
  %v112 = vpack.c.bf16 %v64, %v63
  %v113 = vpack.c.bf16 %v66, %v65
  %v114 = vpack.c.bf16 %v68, %v67
  %v115 = vpack.c.bf16 %v70, %v69
  %v116 = vpack.c.bf16 %v72, %v71
  %v117 = vpack.c.bf16 %v74, %v73
  %v118 = vpack.c.bf16 %v76, %v75
  %v119 = vpack.c.bf16 %v78, %v77
  %v120 = vpack.c.bf16 %v80, %v79
  %v121 = vpack.c.bf16 %v82, %v81
  %v122 = vpack.c.bf16 %v84, %v83
  %v123 = vpack.c.bf16 %v86, %v85
  %v124 = vpack.c.bf16 %v88, %v87
  %v125 = vpack.c.bf16 %v90, %v89
  %v126 = vpack.c.bf16 %v92, %v91
  %v127 = vpack.c.bf16 %v94, %v93
  %v128 = vpack.c.bf16 %v96, %v95
  %v129 = vld [vmem:[%s1] sm:$0xf]
  %v130 = vld [vmem:[%s1 + $0x4] sm:$0xf]
  %v131 = vld [vmem:[%s1 + $0x8] sm:$0x3]
  %v135 = vunpack.c.l.b16 %v129
  %v136 = vunpack.c.l.b16 %v130
  %v137 = vunpack.c.l.b16 %v131
  %v138 = vpack.c.b16 %v136, %v135
  %v139 = vpack.c.b16 %v137, %v137
  %vm141 = vcmask 162816
  %v143 = vsel %vm141, %v97, 0
  %v146 = vsel %vm141, %v98, 0
  %v149 = vsel %vm141, %v99, 0
  %v152 = vsel %vm141, %v100, 0
  %v155 = vsel %vm141, %v101, 0
  %v158 = vsel %vm141, %v102, 0
  %v161 = vsel %vm141, %v103, 0
  %v164 = vsel %vm141, %v104, 0
  %v167 = vsel %vm141, %v105, 0
  %v170 = vsel %vm141, %v106, 0
  %v173 = vsel %vm141, %v107, 0
  %v176 = vsel %vm141, %v108, 0
  %v179 = vsel %vm141, %v109, 0
  %v182 = vsel %vm141, %v110, 0
  %v185 = vsel %vm141, %v111, 0
  %v188 = vsel %vm141, %v112, 0
  %v191 = vsel %vm141, %v113, 0
  %v194 = vsel %vm141, %v114, 0
  %v197 = vsel %vm141, %v115, 0
  %v200 = vsel %vm141, %v116, 0
  %v203 = vsel %vm141, %v117, 0
  %v206 = vsel %vm141, %v118, 0
  %v209 = vsel %vm141, %v119, 0
  %v212 = vsel %vm141, %v120, 0
  %v215 = vsel %vm141, %v121, 0
  %v218 = vsel %vm141, %v122, 0
  %v221 = vsel %vm141, %v123, 0
  %v224 = vsel %vm141, %v124, 0
  %v227 = vsel %vm141, %v125, 0
  %v230 = vsel %vm141, %v126, 0
  %v233 = vsel %vm141, %v127, 0
  %v236 = vsel %vm141, %v128, 0
  %vm238 = vcmask 1041408
  %v240 = vsel %vm238, %v139, 0
  %242 = vmatprep.subr.bf16.mxu0 0
  %243 = vmatpush1.bf16.msra.mxu0 0
  %244 = vmatprep.subr.bf16.mxu0 0
  %245 = vmatpush1.bf16.msra.mxu0 0
  %246 = vmatprep.subr.bf16.mxu0 0
  %247 = vmatpush1.bf16.msra.mxu0 0
  %248 = vmatprep.subr.bf16.mxu0 0
  %249 = vmatpush1.bf16.msra.mxu0 0
  %250 = vmatprep.subr.bf16.mxu0 0
  %251 = vmatpush1.bf16.msra.mxu0 0
  %252 = vmatprep.subr.bf16.mxu0 0
  %253 = vmatpush1.bf16.msra.mxu0 0
  %254 = vmatprep.subr.bf16.mxu0 0
  %255 = vmatpush1.bf16.msra.mxu0 %v240
  %256 = vmatprep.subr.bf16.mxu0 0
  %257 = vmatpush1.bf16.msra.mxu0 %v138
  %258 = vmatprep.subr.bf16.mxu0 0
  %259 = vmatpush2.bf16.msra.mxu0 0
  %260 = vmatprep.subr.bf16.mxu0 0
  %261 = vmatpush2.bf16.msra.mxu0 0
  %262 = vmatprep.subr.bf16.mxu0 0
  %263 = vmatpush2.bf16.msra.mxu0 0
  %264 = vmatprep.subr.bf16.mxu0 0
  %265 = vmatpush2.bf16.msra.mxu0 0
  %266 = vmatprep.subr.bf16.mxu0 0
  %267 = vmatpush2.bf16.msra.mxu0 0
  %268 = vmatprep.subr.bf16.mxu0 0
  %269 = vmatpush2.bf16.msra.mxu0 0
  %270 = vmatprep.subr.bf16.mxu0 0
  %271 = vmatpush2.bf16.msra.mxu0 0
  %272 = vmatprep.subr.bf16.mxu0 0
  %273 = vmatpush2.bf16.msra.mxu0 0
  %274 = vmatprep.mubr.bf16.mxu0 0
  %275 = vmatmul.mubr.bf16.gmra.mxu0 %v143
  %v276 = vpop.f32.mrf.mxu0
  %v277 = vadd.f32 0.0, %v276
  %v278 = vpop.f32.mrf.mxu0
  %v279 = vpop.f32.mrf.mxu0
  %v280 = vadd.f32 0.0, %v279
  %v281 = vpop.f32.mrf.mxu0
  %282 = vmatprep.mubr.bf16.mxu0 0
  %283 = vmatmul.mubr.bf16.gmra.mxu0 %v146
  %v284 = vpop.f32.mrf.mxu0
  %v285 = vadd.f32 0.0, %v284
  %v286 = vpop.f32.mrf.mxu0
  %v287 = vpop.f32.mrf.mxu0
  %v288 = vadd.f32 0.0, %v287
  %v289 = vpop.f32.mrf.mxu0
  %290 = vmatprep.mubr.bf16.mxu0 0
  %291 = vmatmul.mubr.bf16.gmra.mxu0 %v149
  %v292 = vpop.f32.mrf.mxu0
  %v293 = vadd.f32 0.0, %v292
  %v294 = vpop.f32.mrf.mxu0
  %v295 = vpop.f32.mrf.mxu0
  %v296 = vadd.f32 0.0, %v295
  %v297 = vpop.f32.mrf.mxu0
  %298 = vmatprep.mubr.bf16.mxu0 0
  %299 = vmatmul.mubr.bf16.gmra.mxu0 %v152
  %v300 = vpop.f32.mrf.mxu0
  %v301 = vadd.f32 0.0, %v300
  %v302 = vpop.f32.mrf.mxu0
  %v303 = vpop.f32.mrf.mxu0
  %v304 = vadd.f32 0.0, %v303
  %v305 = vpop.f32.mrf.mxu0
  %306 = vmatprep.mubr.bf16.mxu0 0
  %307 = vmatmul.mubr.bf16.gmra.mxu0 %v155
  %v308 = vpop.f32.mrf.mxu0
  %v309 = vadd.f32 0.0, %v308
  %v310 = vpop.f32.mrf.mxu0
  %v311 = vpop.f32.mrf.mxu0
  %v312 = vadd.f32 0.0, %v311
  %v313 = vpop.f32.mrf.mxu0
  %314 = vmatprep.mubr.bf16.mxu0 0
  %315 = vmatmul.mubr.bf16.gmra.mxu0 %v158
  %v316 = vpop.f32.mrf.mxu0
  %v317 = vadd.f32 0.0, %v316
  %v318 = vpop.f32.mrf.mxu0
  %v319 = vpop.f32.mrf.mxu0
  %v320 = vadd.f32 0.0, %v319
  %v321 = vpop.f32.mrf.mxu0
  %322 = vmatprep.mubr.bf16.mxu0 0
  %323 = vmatmul.mubr.bf16.gmra.mxu0 %v161
  %v324 = vpop.f32.mrf.mxu0
  %v325 = vadd.f32 0.0, %v324
  %v326 = vpop.f32.mrf.mxu0
  %v327 = vpop.f32.mrf.mxu0
  %v328 = vadd.f32 0.0, %v327
  %v329 = vpop.f32.mrf.mxu0
  %330 = vmatprep.mubr.bf16.mxu0 0
  %331 = vmatmul.mubr.bf16.gmra.mxu0 %v164
  %v332 = vpop.f32.mrf.mxu0
  %v333 = vadd.f32 0.0, %v332
  %v334 = vpop.f32.mrf.mxu0
  %v335 = vpop.f32.mrf.mxu0
  %v336 = vadd.f32 0.0, %v335
  %v337 = vpop.f32.mrf.mxu0
  %338 = vmatprep.mubr.bf16.mxu0 0
  %339 = vmatmul.mubr.bf16.gmra.mxu0 %v167
  %v340 = vpop.f32.mrf.mxu0
  %v341 = vadd.f32 0.0, %v340
  %v342 = vpop.f32.mrf.mxu0
  %v343 = vpop.f32.mrf.mxu0
  %v344 = vadd.f32 0.0, %v343
  %v345 = vpop.f32.mrf.mxu0
  %346 = vmatprep.mubr.bf16.mxu0 0
  %347 = vmatmul.mubr.bf16.gmra.mxu0 %v170
  %v348 = vpop.f32.mrf.mxu0
  %v349 = vadd.f32 0.0, %v348
  %v350 = vpop.f32.mrf.mxu0
  %v351 = vpop.f32.mrf.mxu0
  %v352 = vadd.f32 0.0, %v351
  %v353 = vpop.f32.mrf.mxu0
  %354 = vmatprep.mubr.bf16.mxu0 0
  %355 = vmatmul.mubr.bf16.gmra.mxu0 %v173
  %v356 = vpop.f32.mrf.mxu0
  %v357 = vadd.f32 0.0, %v356
  %v358 = vpop.f32.mrf.mxu0
  %v359 = vpop.f32.mrf.mxu0
  %v360 = vadd.f32 0.0, %v359
  %v361 = vpop.f32.mrf.mxu0
  %362 = vmatprep.mubr.bf16.mxu0 0
  %363 = vmatmul.mubr.bf16.gmra.mxu0 %v176
  %v364 = vpop.f32.mrf.mxu0
  %v365 = vadd.f32 0.0, %v364
  %v366 = vpop.f32.mrf.mxu0
  %v367 = vpop.f32.mrf.mxu0
  %v368 = vadd.f32 0.0, %v367
  %v369 = vpop.f32.mrf.mxu0
  %370 = vmatprep.mubr.bf16.mxu0 0
  %371 = vmatmul.mubr.bf16.gmra.mxu0 %v179
  %v372 = vpop.f32.mrf.mxu0
  %v373 = vadd.f32 0.0, %v372
  %v374 = vpop.f32.mrf.mxu0
  %v375 = vpop.f32.mrf.mxu0
  %v376 = vadd.f32 0.0, %v375
  %v377 = vpop.f32.mrf.mxu0
  %378 = vmatprep.mubr.bf16.mxu0 0
  %379 = vmatmul.mubr.bf16.gmra.mxu0 %v182
  %v380 = vpop.f32.mrf.mxu0
  %v381 = vadd.f32 0.0, %v380
  %v382 = vpop.f32.mrf.mxu0
  %v383 = vpop.f32.mrf.mxu0
  %v384 = vadd.f32 0.0, %v383
  %v385 = vpop.f32.mrf.mxu0
  %386 = vmatprep.mubr.bf16.mxu0 0
  %387 = vmatmul.mubr.bf16.gmra.mxu0 %v185
  %v388 = vpop.f32.mrf.mxu0
  %v389 = vadd.f32 0.0, %v388
  %v390 = vpop.f32.mrf.mxu0
  %v391 = vpop.f32.mrf.mxu0
  %v392 = vadd.f32 0.0, %v391
  %v393 = vpop.f32.mrf.mxu0
  %394 = vmatprep.mubr.bf16.mxu0 0
  %395 = vmatmul.mubr.bf16.gmra.mxu0 %v188
  %v396 = vpop.f32.mrf.mxu0
  %v397 = vadd.f32 0.0, %v396
  %v398 = vpop.f32.mrf.mxu0
  %v399 = vpop.f32.mrf.mxu0
  %v400 = vadd.f32 0.0, %v399
  %v401 = vpop.f32.mrf.mxu0
  %402 = vmatprep.mubr.bf16.mxu0 0
  %403 = vmatmul.mubr.bf16.gmra.mxu0 %v191
  %v404 = vpop.f32.mrf.mxu0
  %v405 = vadd.f32 0.0, %v404
  %v406 = vpop.f32.mrf.mxu0
  %v407 = vpop.f32.mrf.mxu0
  %v408 = vadd.f32 0.0, %v407
  %v409 = vpop.f32.mrf.mxu0
  %410 = vmatprep.mubr.bf16.mxu0 0
  %411 = vmatmul.mubr.bf16.gmra.mxu0 %v194
  %v412 = vpop.f32.mrf.mxu0
  %v413 = vadd.f32 0.0, %v412
  %v414 = vpop.f32.mrf.mxu0
  %v415 = vpop.f32.mrf.mxu0
  %v416 = vadd.f32 0.0, %v415
  %v417 = vpop.f32.mrf.mxu0
  %418 = vmatprep.mubr.bf16.mxu0 0
  %419 = vmatmul.mubr.bf16.gmra.mxu0 %v197
  %v420 = vpop.f32.mrf.mxu0
  %v421 = vadd.f32 0.0, %v420
  %v422 = vpop.f32.mrf.mxu0
  %v423 = vpop.f32.mrf.mxu0
  %v424 = vadd.f32 0.0, %v423
  %v425 = vpop.f32.mrf.mxu0
  %426 = vmatprep.mubr.bf16.mxu0 0
  %427 = vmatmul.mubr.bf16.gmra.mxu0 %v200
  %v428 = vpop.f32.mrf.mxu0
  %v429 = vadd.f32 0.0, %v428
  %v430 = vpop.f32.mrf.mxu0
  %v431 = vpop.f32.mrf.mxu0
  %v432 = vadd.f32 0.0, %v431
  %v433 = vpop.f32.mrf.mxu0
  %434 = vmatprep.mubr.bf16.mxu0 0
  %435 = vmatmul.mubr.bf16.gmra.mxu0 %v203
  %v436 = vpop.f32.mrf.mxu0
  %v437 = vadd.f32 0.0, %v436
  %v438 = vpop.f32.mrf.mxu0
  %v439 = vpop.f32.mrf.mxu0
  %v440 = vadd.f32 0.0, %v439
  %v441 = vpop.f32.mrf.mxu0
  %442 = vmatprep.mubr.bf16.mxu0 0
  %443 = vmatmul.mubr.bf16.gmra.mxu0 %v206
  %v444 = vpop.f32.mrf.mxu0
  %v445 = vadd.f32 0.0, %v444
  %v446 = vpop.f32.mrf.mxu0
  %v447 = vpop.f32.mrf.mxu0
  %v448 = vadd.f32 0.0, %v447
  %v449 = vpop.f32.mrf.mxu0
  %450 = vmatprep.mubr.bf16.mxu0 0
  %451 = vmatmul.mubr.bf16.gmra.mxu0 %v209
  %v452 = vpop.f32.mrf.mxu0
  %v453 = vadd.f32 0.0, %v452
  %v454 = vpop.f32.mrf.mxu0
  %v455 = vpop.f32.mrf.mxu0
  %v456 = vadd.f32 0.0, %v455
  %v457 = vpop.f32.mrf.mxu0
  %458 = vmatprep.mubr.bf16.mxu0 0
  %459 = vmatmul.mubr.bf16.gmra.mxu0 %v212
  %v460 = vpop.f32.mrf.mxu0
  %v461 = vadd.f32 0.0, %v460
  %v462 = vpop.f32.mrf.mxu0
  %v463 = vpop.f32.mrf.mxu0
  %v464 = vadd.f32 0.0, %v463
  %v465 = vpop.f32.mrf.mxu0
  %466 = vmatprep.mubr.bf16.mxu0 0
  %467 = vmatmul.mubr.bf16.gmra.mxu0 %v215
  %v468 = vpop.f32.mrf.mxu0
  %v469 = vadd.f32 0.0, %v468
  %v470 = vpop.f32.mrf.mxu0
  %v471 = vpop.f32.mrf.mxu0
  %v472 = vadd.f32 0.0, %v471
  %v473 = vpop.f32.mrf.mxu0
  %474 = vmatprep.mubr.bf16.mxu0 0
  %475 = vmatmul.mubr.bf16.gmra.mxu0 %v218
  %v476 = vpop.f32.mrf.mxu0
  %v477 = vadd.f32 0.0, %v476
  %v478 = vpop.f32.mrf.mxu0
  %v479 = vpop.f32.mrf.mxu0
  %v480 = vadd.f32 0.0, %v479
  %v481 = vpop.f32.mrf.mxu0
  %482 = vmatprep.mubr.bf16.mxu0 0
  %483 = vmatmul.mubr.bf16.gmra.mxu0 %v221
  %v484 = vpop.f32.mrf.mxu0
  %v485 = vadd.f32 0.0, %v484
  %v486 = vpop.f32.mrf.mxu0
  %v487 = vpop.f32.mrf.mxu0
  %v488 = vadd.f32 0.0, %v487
  %v489 = vpop.f32.mrf.mxu0
  %490 = vmatprep.mubr.bf16.mxu0 0
  %491 = vmatmul.mubr.bf16.gmra.mxu0 %v224
  %v492 = vpop.f32.mrf.mxu0
  %v493 = vadd.f32 0.0, %v492
  %v494 = vpop.f32.mrf.mxu0
  %v495 = vpop.f32.mrf.mxu0
  %v496 = vadd.f32 0.0, %v495
  %v497 = vpop.f32.mrf.mxu0
  %498 = vmatprep.mubr.bf16.mxu0 0
  %499 = vmatmul.mubr.bf16.gmra.mxu0 %v227
  %v500 = vpop.f32.mrf.mxu0
  %v501 = vadd.f32 0.0, %v500
  %v502 = vpop.f32.mrf.mxu0
  %v503 = vpop.f32.mrf.mxu0
  %v504 = vadd.f32 0.0, %v503
  %v505 = vpop.f32.mrf.mxu0
  %506 = vmatprep.mubr.bf16.mxu0 0
  %507 = vmatmul.mubr.bf16.gmra.mxu0 %v230
  %v508 = vpop.f32.mrf.mxu0
  %v509 = vadd.f32 0.0, %v508
  %v510 = vpop.f32.mrf.mxu0
  %v511 = vpop.f32.mrf.mxu0
  %v512 = vadd.f32 0.0, %v511
  %v513 = vpop.f32.mrf.mxu0
  %514 = vmatprep.mubr.bf16.mxu0 0
  %515 = vmatmul.mubr.bf16.gmra.mxu0 %v233
  %v516 = vpop.f32.mrf.mxu0
  %v517 = vadd.f32 0.0, %v516
  %v518 = vpop.f32.mrf.mxu0
  %v519 = vpop.f32.mrf.mxu0
  %v520 = vadd.f32 0.0, %v519
  %v521 = vpop.f32.mrf.mxu0
  %522 = vmatprep.mubr.bf16.mxu0 0
  %523 = vmatmul.mubr.bf16.gmra.mxu0 %v236
  %v524 = vpop.f32.mrf.mxu0
  %v525 = vadd.f32 0.0, %v524
  %v526 = vpop.f32.mrf.mxu0
  %v527 = vpop.f32.mrf.mxu0
  %v528 = vadd.f32 0.0, %v527
  %v529 = vpop.f32.mrf.mxu0
  %530 = vdwg.mxu0
  %v531 = vld [vmem:[%s2] sm:$0x1]
  %v533 = vlaneseq
  %v534 = vshrl.u32 %v533, 7
  %v535 = vsub.s32 0, %v534
  %v536 = vrot.slane %v531, %v535
  %537 = vrot.lane.b32.xlu0 %v536, 32
  %v538 = vpop.permute.xlu0 %537
  %v540 = vadd.f32 %v277, %v538
  %v541 = vadd.f32 %v280, %v538
  %v542 = vadd.f32 %v285, %v538
  %v543 = vadd.f32 %v288, %v538
  %v544 = vadd.f32 %v293, %v538
  %v545 = vadd.f32 %v296, %v538
  %v546 = vadd.f32 %v301, %v538
  %v547 = vadd.f32 %v304, %v538
  %v548 = vadd.f32 %v309, %v538
  %v549 = vadd.f32 %v312, %v538
  %v550 = vadd.f32 %v317, %v538
  %v551 = vadd.f32 %v320, %v538
  %v552 = vadd.f32 %v325, %v538
  %v553 = vadd.f32 %v328, %v538
  %v554 = vadd.f32 %v333, %v538
  %v555 = vadd.f32 %v336, %v538
  %v556 = vadd.f32 %v341, %v538
  %v557 = vadd.f32 %v344, %v538
  %v558 = vadd.f32 %v349, %v538
  %v559 = vadd.f32 %v352, %v538
  %v560 = vadd.f32 %v357, %v538
  %v561 = vadd.f32 %v360, %v538
  %v562 = vadd.f32 %v365, %v538
  %v563 = vadd.f32 %v368, %v538
  %v564 = vadd.f32 %v373, %v538
  %v565 = vadd.f32 %v376, %v538
  %v566 = vadd.f32 %v381, %v538
  %v567 = vadd.f32 %v384, %v538
  %v568 = vadd.f32 %v389, %v538
  %v569 = vadd.f32 %v392, %v538
  %v570 = vadd.f32 %v397, %v538
  %v571 = vadd.f32 %v400, %v538
  %v572 = vadd.f32 %v405, %v538
  %v573 = vadd.f32 %v408, %v538
  %v574 = vadd.f32 %v413, %v538
  %v575 = vadd.f32 %v416, %v538
  %v576 = vadd.f32 %v421, %v538
  %v577 = vadd.f32 %v424, %v538
  %v578 = vadd.f32 %v429, %v538
  %v579 = vadd.f32 %v432, %v538
  %v580 = vadd.f32 %v437, %v538
  %v581 = vadd.f32 %v440, %v538
  %v582 = vadd.f32 %v445, %v538
  %v583 = vadd.f32 %v448, %v538
  %v584 = vadd.f32 %v453, %v538
  %v585 = vadd.f32 %v456, %v538
  %v586 = vadd.f32 %v461, %v538
  %v587 = vadd.f32 %v464, %v538
  %v588 = vadd.f32 %v469, %v538
  %v589 = vadd.f32 %v472, %v538
  %v590 = vadd.f32 %v477, %v538
  %v591 = vadd.f32 %v480, %v538
  %v592 = vadd.f32 %v485, %v538
  %v593 = vadd.f32 %v488, %v538
  %v594 = vadd.f32 %v493, %v538
  %v595 = vadd.f32 %v496, %v538
  %v596 = vadd.f32 %v501, %v538
  %v597 = vadd.f32 %v504, %v538
  %v598 = vadd.f32 %v509, %v538
  %v599 = vadd.f32 %v512, %v538
  %v600 = vadd.f32 %v517, %v538
  %v601 = vadd.f32 %v520, %v538
  %v602 = vadd.f32 %v525, %v538
  %v603 = vadd.f32 %v528, %v538
  %v604 = vmax.f32 %v540, 0.0
  %v605 = vmax.f32 %v541, 0.0
  %v606 = vmax.f32 %v542, 0.0
  %v607 = vmax.f32 %v543, 0.0
  %v608 = vmax.f32 %v544, 0.0
  %v609 = vmax.f32 %v545, 0.0
  %v610 = vmax.f32 %v546, 0.0
  %v611 = vmax.f32 %v547, 0.0
  %v612 = vmax.f32 %v548, 0.0
  %v613 = vmax.f32 %v549, 0.0
  %v614 = vmax.f32 %v550, 0.0
  %v615 = vmax.f32 %v551, 0.0
  %v616 = vmax.f32 %v552, 0.0
  %v617 = vmax.f32 %v553, 0.0
  %v618 = vmax.f32 %v554, 0.0
  %v619 = vmax.f32 %v555, 0.0
  %v620 = vmax.f32 %v556, 0.0
  %v621 = vmax.f32 %v557, 0.0
  %v622 = vmax.f32 %v558, 0.0
  %v623 = vmax.f32 %v559, 0.0
  %v624 = vmax.f32 %v560, 0.0
  %v625 = vmax.f32 %v561, 0.0
  %v626 = vmax.f32 %v562, 0.0
  %v627 = vmax.f32 %v563, 0.0
  %v628 = vmax.f32 %v564, 0.0
  %v629 = vmax.f32 %v565, 0.0
  %v630 = vmax.f32 %v566, 0.0
  %v631 = vmax.f32 %v567, 0.0
  %v632 = vmax.f32 %v568, 0.0
  %v633 = vmax.f32 %v569, 0.0
  %v634 = vmax.f32 %v570, 0.0
  %v635 = vmax.f32 %v571, 0.0
  %v636 = vmax.f32 %v572, 0.0
  %v637 = vmax.f32 %v573, 0.0
  %v638 = vmax.f32 %v574, 0.0
  %v639 = vmax.f32 %v575, 0.0
  %v640 = vmax.f32 %v576, 0.0
  %v641 = vmax.f32 %v577, 0.0
  %v642 = vmax.f32 %v578, 0.0
  %v643 = vmax.f32 %v579, 0.0
  %v644 = vmax.f32 %v580, 0.0
  %v645 = vmax.f32 %v581, 0.0
  %v646 = vmax.f32 %v582, 0.0
  %v647 = vmax.f32 %v583, 0.0
  %v648 = vmax.f32 %v584, 0.0
  %v649 = vmax.f32 %v585, 0.0
  %v650 = vmax.f32 %v586, 0.0
  %v651 = vmax.f32 %v587, 0.0
  %v652 = vmax.f32 %v588, 0.0
  %v653 = vmax.f32 %v589, 0.0
  %v654 = vmax.f32 %v590, 0.0
  %v655 = vmax.f32 %v591, 0.0
  %v656 = vmax.f32 %v592, 0.0
  %v657 = vmax.f32 %v593, 0.0
  %v658 = vmax.f32 %v594, 0.0
  %v659 = vmax.f32 %v595, 0.0
  %v660 = vmax.f32 %v596, 0.0
  %v661 = vmax.f32 %v597, 0.0
  %v662 = vmax.f32 %v598, 0.0
  %v663 = vmax.f32 %v599, 0.0
  %v664 = vmax.f32 %v600, 0.0
  %v665 = vmax.f32 %v601, 0.0
  %v666 = vmax.f32 %v602, 0.0
  %v667 = vmax.f32 %v603, 0.0
  %v668 = vpack.c.bf16 %v605, %v604
  %v669 = vpack.c.bf16 %v607, %v606
  %v670 = vpack.c.bf16 %v609, %v608
  %v671 = vpack.c.bf16 %v611, %v610
  %v672 = vpack.c.bf16 %v613, %v612
  %v673 = vpack.c.bf16 %v615, %v614
  %v674 = vpack.c.bf16 %v617, %v616
  %v675 = vpack.c.bf16 %v619, %v618
  %v676 = vpack.c.bf16 %v621, %v620
  %v677 = vpack.c.bf16 %v623, %v622
  %v678 = vpack.c.bf16 %v625, %v624
  %v679 = vpack.c.bf16 %v627, %v626
  %v680 = vpack.c.bf16 %v629, %v628
  %v681 = vpack.c.bf16 %v631, %v630
  %v682 = vpack.c.bf16 %v633, %v632
  %v683 = vpack.c.bf16 %v635, %v634
  %v684 = vpack.c.bf16 %v637, %v636
  %v685 = vpack.c.bf16 %v639, %v638
  %v686 = vpack.c.bf16 %v641, %v640
  %v687 = vpack.c.bf16 %v643, %v642
  %v688 = vpack.c.bf16 %v645, %v644
  %v689 = vpack.c.bf16 %v647, %v646
  %v690 = vpack.c.bf16 %v649, %v648
  %v691 = vpack.c.bf16 %v651, %v650
  %v692 = vpack.c.bf16 %v653, %v652
  %v693 = vpack.c.bf16 %v655, %v654
  %v694 = vpack.c.bf16 %v657, %v656
  %v695 = vpack.c.bf16 %v659, %v658
  %v696 = vpack.c.bf16 %v661, %v660
  %v697 = vpack.c.bf16 %v663, %v662
  %v698 = vpack.c.bf16 %v665, %v664
  %v699 = vpack.c.bf16 %v667, %v666
  %v700 = vld [vmem:[%s3] sm:$0xf]
  %733 = vrot.lane.b32.xlu0 %v668, 96
  %v734 = vpop.permute.xlu0 %733
  %735 = vrot.lane.b32.xlu0 %v669, 96
  %v736 = vpop.permute.xlu0 %735
  %737 = vrot.lane.b32.xlu0 %v670, 96
  %v738 = vpop.permute.xlu0 %737
  %739 = vrot.lane.b32.xlu0 %v671, 96
  %v740 = vpop.permute.xlu0 %739
  %741 = vrot.lane.b32.xlu0 %v672, 96
  %v742 = vpop.permute.xlu0 %741
  %743 = vrot.lane.b32.xlu0 %v673, 96
  %v744 = vpop.permute.xlu0 %743
  %745 = vrot.lane.b32.xlu0 %v674, 96
  %v746 = vpop.permute.xlu0 %745
  %747 = vrot.lane.b32.xlu0 %v675, 96
  %v748 = vpop.permute.xlu0 %747
  %749 = vrot.lane.b32.xlu0 %v676, 96
  %v750 = vpop.permute.xlu0 %749
  %751 = vrot.lane.b32.xlu0 %v677, 96
  %v752 = vpop.permute.xlu0 %751
  %753 = vrot.lane.b32.xlu0 %v678, 96
  %v754 = vpop.permute.xlu0 %753
  %755 = vrot.lane.b32.xlu0 %v679, 96
  %v756 = vpop.permute.xlu0 %755
  %757 = vrot.lane.b32.xlu0 %v680, 96
  %v758 = vpop.permute.xlu0 %757
  %759 = vrot.lane.b32.xlu0 %v681, 96
  %v760 = vpop.permute.xlu0 %759
  %761 = vrot.lane.b32.xlu0 %v682, 96
  %v762 = vpop.permute.xlu0 %761
  %763 = vrot.lane.b32.xlu0 %v683, 96
  %v764 = vpop.permute.xlu0 %763
  %765 = vrot.lane.b32.xlu0 %v684, 96
  %v766 = vpop.permute.xlu0 %765
  %767 = vrot.lane.b32.xlu0 %v685, 96
  %v768 = vpop.permute.xlu0 %767
  %769 = vrot.lane.b32.xlu0 %v686, 96
  %v770 = vpop.permute.xlu0 %769
  %771 = vrot.lane.b32.xlu0 %v687, 96
  %v772 = vpop.permute.xlu0 %771
  %773 = vrot.lane.b32.xlu0 %v688, 96
  %v774 = vpop.permute.xlu0 %773
  %775 = vrot.lane.b32.xlu0 %v689, 96
  %v776 = vpop.permute.xlu0 %775
  %777 = vrot.lane.b32.xlu0 %v690, 96
  %v778 = vpop.permute.xlu0 %777
  %779 = vrot.lane.b32.xlu0 %v691, 96
  %v780 = vpop.permute.xlu0 %779
  %781 = vrot.lane.b32.xlu0 %v692, 96
  %v782 = vpop.permute.xlu0 %781
  %783 = vrot.lane.b32.xlu0 %v693, 96
  %v784 = vpop.permute.xlu0 %783
  %785 = vrot.lane.b32.xlu0 %v694, 96
  %v786 = vpop.permute.xlu0 %785
  %787 = vrot.lane.b32.xlu0 %v695, 96
  %v788 = vpop.permute.xlu0 %787
  %789 = vrot.lane.b32.xlu0 %v696, 96
  %v790 = vpop.permute.xlu0 %789
  %791 = vrot.lane.b32.xlu0 %v697, 96
  %v792 = vpop.permute.xlu0 %791
  %793 = vrot.lane.b32.xlu0 %v698, 96
  %v794 = vpop.permute.xlu0 %793
  %795 = vrot.lane.b32.xlu0 %v699, 96
  %v796 = vpop.permute.xlu0 %795
  %vm797 = vcmask 64512
  %v799 = vsel %vm797, %v734, 0
  %v802 = vsel %vm797, %v736, 0
  %v805 = vsel %vm797, %v738, 0
  %v808 = vsel %vm797, %v740, 0
  %v811 = vsel %vm797, %v742, 0
  %v814 = vsel %vm797, %v744, 0
  %v817 = vsel %vm797, %v746, 0
  %v820 = vsel %vm797, %v748, 0
  %v823 = vsel %vm797, %v750, 0
  %v826 = vsel %vm797, %v752, 0
  %v829 = vsel %vm797, %v754, 0
  %v832 = vsel %vm797, %v756, 0
  %v835 = vsel %vm797, %v758, 0
  %v838 = vsel %vm797, %v760, 0
  %v841 = vsel %vm797, %v762, 0
  %v844 = vsel %vm797, %v764, 0
  %v847 = vsel %vm797, %v766, 0
  %v850 = vsel %vm797, %v768, 0
  %v853 = vsel %vm797, %v770, 0
  %v856 = vsel %vm797, %v772, 0
  %v859 = vsel %vm797, %v774, 0
  %v862 = vsel %vm797, %v776, 0
  %v865 = vsel %vm797, %v778, 0
  %v868 = vsel %vm797, %v780, 0
  %v871 = vsel %vm797, %v782, 0
  %v874 = vsel %vm797, %v784, 0
  %v877 = vsel %vm797, %v786, 0
  %v880 = vsel %vm797, %v788, 0
  %v883 = vsel %vm797, %v790, 0
  %v886 = vsel %vm797, %v792, 0
  %v889 = vsel %vm797, %v794, 0
  %v892 = vsel %vm797, %v796, 0
  %vm894 = vcmask 1043456
  %v896 = vsel %vm894, %v700, 0
  %898 = vmatprep.subr.bf16.mxu0 0
  %899 = vmatpush1.bf16.msra.mxu0 0
  %900 = vmatprep.subr.bf16.mxu0 0
  %901 = vmatpush1.bf16.msra.mxu0 0
  %902 = vmatprep.subr.bf16.mxu0 0
  %903 = vmatpush1.bf16.msra.mxu0 0
  %904 = vmatprep.subr.bf16.mxu0 0
  %905 = vmatpush1.bf16.msra.mxu0 0
  %906 = vmatprep.subr.bf16.mxu0 0
  %907 = vmatpush1.bf16.msra.mxu0 0
  %908 = vmatprep.subr.bf16.mxu0 0
  %909 = vmatpush1.bf16.msra.mxu0 0
  %910 = vmatprep.subr.bf16.mxu0 0
  %911 = vmatpush1.bf16.msra.mxu0 0
  %912 = vmatprep.subr.bf16.mxu0 0
  %913 = vmatpush1.bf16.msra.mxu0 %v896
  %914 = vmatprep.subr.bf16.mxu0 0
  %915 = vmatpush2.bf16.msra.mxu0 0
  %916 = vmatprep.subr.bf16.mxu0 0
  %917 = vmatpush2.bf16.msra.mxu0 0
  %918 = vmatprep.subr.bf16.mxu0 0
  %919 = vmatpush2.bf16.msra.mxu0 0
  %920 = vmatprep.subr.bf16.mxu0 0
  %921 = vmatpush2.bf16.msra.mxu0 0
  %922 = vmatprep.subr.bf16.mxu0 0
  %923 = vmatpush2.bf16.msra.mxu0 0
  %924 = vmatprep.subr.bf16.mxu0 0
  %925 = vmatpush2.bf16.msra.mxu0 0
  %926 = vmatprep.subr.bf16.mxu0 0
  %927 = vmatpush2.bf16.msra.mxu0 0
  %928 = vmatprep.subr.bf16.mxu0 0
  %929 = vmatpush2.bf16.msra.mxu0 0
  %930 = vmatprep.mubr.bf16.mxu0 0
  %931 = vmatmul.mubr.bf16.gmra.mxu0 %v799
  %v932 = vpop.f32.mrf.mxu0
  %v933 = vadd.f32 %v277, %v932
  %v934 = vpop.f32.mrf.mxu0
  %v935 = vpop.f32.mrf.mxu0
  %v936 = vadd.f32 %v280, %v935
  %v937 = vpop.f32.mrf.mxu0
  %938 = vmatprep.mubr.bf16.mxu0 0
  %939 = vmatmul.mubr.bf16.gmra.mxu0 %v802
  %v940 = vpop.f32.mrf.mxu0
  %v941 = vadd.f32 %v285, %v940
  %v942 = vpop.f32.mrf.mxu0
  %v943 = vpop.f32.mrf.mxu0
  %v944 = vadd.f32 %v288, %v943
  %v945 = vpop.f32.mrf.mxu0
  %946 = vmatprep.mubr.bf16.mxu0 0
  %947 = vmatmul.mubr.bf16.gmra.mxu0 %v805
  %v948 = vpop.f32.mrf.mxu0
  %v949 = vadd.f32 %v293, %v948
  %v950 = vpop.f32.mrf.mxu0
  %v951 = vpop.f32.mrf.mxu0
  %v952 = vadd.f32 %v296, %v951
  %v953 = vpop.f32.mrf.mxu0
  %954 = vmatprep.mubr.bf16.mxu0 0
  %955 = vmatmul.mubr.bf16.gmra.mxu0 %v808
  %v956 = vpop.f32.mrf.mxu0
  %v957 = vadd.f32 %v301, %v956
  %v958 = vpop.f32.mrf.mxu0
  %v959 = vpop.f32.mrf.mxu0
  %v960 = vadd.f32 %v304, %v959
  %v961 = vpop.f32.mrf.mxu0
  %962 = vmatprep.mubr.bf16.mxu0 0
  %963 = vmatmul.mubr.bf16.gmra.mxu0 %v811
  %v964 = vpop.f32.mrf.mxu0
  %v965 = vadd.f32 %v309, %v964
  %v966 = vpop.f32.mrf.mxu0
  %v967 = vpop.f32.mrf.mxu0
  %v968 = vadd.f32 %v312, %v967
  %v969 = vpop.f32.mrf.mxu0
  %970 = vmatprep.mubr.bf16.mxu0 0
  %971 = vmatmul.mubr.bf16.gmra.mxu0 %v814
  %v972 = vpop.f32.mrf.mxu0
  %v973 = vadd.f32 %v317, %v972
  %v974 = vpop.f32.mrf.mxu0
  %v975 = vpop.f32.mrf.mxu0
  %v976 = vadd.f32 %v320, %v975
  %v977 = vpop.f32.mrf.mxu0
  %978 = vmatprep.mubr.bf16.mxu0 0
  %979 = vmatmul.mubr.bf16.gmra.mxu0 %v817
  %v980 = vpop.f32.mrf.mxu0
  %v981 = vadd.f32 %v325, %v980
  %v982 = vpop.f32.mrf.mxu0
  %v983 = vpop.f32.mrf.mxu0
  %v984 = vadd.f32 %v328, %v983
  %v985 = vpop.f32.mrf.mxu0
  %986 = vmatprep.mubr.bf16.mxu0 0
  %987 = vmatmul.mubr.bf16.gmra.mxu0 %v820
  %v988 = vpop.f32.mrf.mxu0
  %v989 = vadd.f32 %v333, %v988
  %v990 = vpop.f32.mrf.mxu0
  %v991 = vpop.f32.mrf.mxu0
  %v992 = vadd.f32 %v336, %v991
  %v993 = vpop.f32.mrf.mxu0
  %994 = vmatprep.mubr.bf16.mxu0 0
  %995 = vmatmul.mubr.bf16.gmra.mxu0 %v823
  %v996 = vpop.f32.mrf.mxu0
  %v997 = vadd.f32 %v341, %v996
  %v998 = vpop.f32.mrf.mxu0
  %v999 = vpop.f32.mrf.mxu0
  %v1000 = vadd.f32 %v344, %v999
  %v1001 = vpop.f32.mrf.mxu0
  %1002 = vmatprep.mubr.bf16.mxu0 0
  %1003 = vmatmul.mubr.bf16.gmra.mxu0 %v826
  %v1004 = vpop.f32.mrf.mxu0
  %v1005 = vadd.f32 %v349, %v1004
  %v1006 = vpop.f32.mrf.mxu0
  %v1007 = vpop.f32.mrf.mxu0
  %v1008 = vadd.f32 %v352, %v1007
  %v1009 = vpop.f32.mrf.mxu0
  %1010 = vmatprep.mubr.bf16.mxu0 0
  %1011 = vmatmul.mubr.bf16.gmra.mxu0 %v829
  %v1012 = vpop.f32.mrf.mxu0
  %v1013 = vadd.f32 %v357, %v1012
  %v1014 = vpop.f32.mrf.mxu0
  %v1015 = vpop.f32.mrf.mxu0
  %v1016 = vadd.f32 %v360, %v1015
  %v1017 = vpop.f32.mrf.mxu0
  %1018 = vmatprep.mubr.bf16.mxu0 0
  %1019 = vmatmul.mubr.bf16.gmra.mxu0 %v832
  %v1020 = vpop.f32.mrf.mxu0
  %v1021 = vadd.f32 %v365, %v1020
  %v1022 = vpop.f32.mrf.mxu0
  %v1023 = vpop.f32.mrf.mxu0
  %v1024 = vadd.f32 %v368, %v1023
  %v1025 = vpop.f32.mrf.mxu0
  %1026 = vmatprep.mubr.bf16.mxu0 0
  %1027 = vmatmul.mubr.bf16.gmra.mxu0 %v835
  %v1028 = vpop.f32.mrf.mxu0
  %v1029 = vadd.f32 %v373, %v1028
  %v1030 = vpop.f32.mrf.mxu0
  %v1031 = vpop.f32.mrf.mxu0
  %v1032 = vadd.f32 %v376, %v1031
  %v1033 = vpop.f32.mrf.mxu0
  %1034 = vmatprep.mubr.bf16.mxu0 0
  %1035 = vmatmul.mubr.bf16.gmra.mxu0 %v838
  %v1036 = vpop.f32.mrf.mxu0
  %v1037 = vadd.f32 %v381, %v1036
  %v1038 = vpop.f32.mrf.mxu0
  %v1039 = vpop.f32.mrf.mxu0
  %v1040 = vadd.f32 %v384, %v1039
  %v1041 = vpop.f32.mrf.mxu0
  %1042 = vmatprep.mubr.bf16.mxu0 0
  %1043 = vmatmul.mubr.bf16.gmra.mxu0 %v841
  %v1044 = vpop.f32.mrf.mxu0
  %v1045 = vadd.f32 %v389, %v1044
  %v1046 = vpop.f32.mrf.mxu0
  %v1047 = vpop.f32.mrf.mxu0
  %v1048 = vadd.f32 %v392, %v1047
  %v1049 = vpop.f32.mrf.mxu0
  %1050 = vmatprep.mubr.bf16.mxu0 0
  %1051 = vmatmul.mubr.bf16.gmra.mxu0 %v844
  %v1052 = vpop.f32.mrf.mxu0
  %v1053 = vadd.f32 %v397, %v1052
  %v1054 = vpop.f32.mrf.mxu0
  %v1055 = vpop.f32.mrf.mxu0
  %v1056 = vadd.f32 %v400, %v1055
  %v1057 = vpop.f32.mrf.mxu0
  %1058 = vmatprep.mubr.bf16.mxu0 0
  %1059 = vmatmul.mubr.bf16.gmra.mxu0 %v847
  %v1060 = vpop.f32.mrf.mxu0
  %v1061 = vadd.f32 %v405, %v1060
  %v1062 = vpop.f32.mrf.mxu0
  %v1063 = vpop.f32.mrf.mxu0
  %v1064 = vadd.f32 %v408, %v1063
  %v1065 = vpop.f32.mrf.mxu0
  %1066 = vmatprep.mubr.bf16.mxu0 0
  %1067 = vmatmul.mubr.bf16.gmra.mxu0 %v850
  %v1068 = vpop.f32.mrf.mxu0
  %v1069 = vadd.f32 %v413, %v1068
  %v1070 = vpop.f32.mrf.mxu0
  %v1071 = vpop.f32.mrf.mxu0
  %v1072 = vadd.f32 %v416, %v1071
  %v1073 = vpop.f32.mrf.mxu0
  %1074 = vmatprep.mubr.bf16.mxu0 0
  %1075 = vmatmul.mubr.bf16.gmra.mxu0 %v853
  %v1076 = vpop.f32.mrf.mxu0
  %v1077 = vadd.f32 %v421, %v1076
  %v1078 = vpop.f32.mrf.mxu0
  %v1079 = vpop.f32.mrf.mxu0
  %v1080 = vadd.f32 %v424, %v1079
  %v1081 = vpop.f32.mrf.mxu0
  %1082 = vmatprep.mubr.bf16.mxu0 0
  %1083 = vmatmul.mubr.bf16.gmra.mxu0 %v856
  %v1084 = vpop.f32.mrf.mxu0
  %v1085 = vadd.f32 %v429, %v1084
  %v1086 = vpop.f32.mrf.mxu0
  %v1087 = vpop.f32.mrf.mxu0
  %v1088 = vadd.f32 %v432, %v1087
  %v1089 = vpop.f32.mrf.mxu0
  %1090 = vmatprep.mubr.bf16.mxu0 0
  %1091 = vmatmul.mubr.bf16.gmra.mxu0 %v859
  %v1092 = vpop.f32.mrf.mxu0
  %v1093 = vadd.f32 %v437, %v1092
  %v1094 = vpop.f32.mrf.mxu0
  %v1095 = vpop.f32.mrf.mxu0
  %v1096 = vadd.f32 %v440, %v1095
  %v1097 = vpop.f32.mrf.mxu0
  %1098 = vmatprep.mubr.bf16.mxu0 0
  %1099 = vmatmul.mubr.bf16.gmra.mxu0 %v862
  %v1100 = vpop.f32.mrf.mxu0
  %v1101 = vadd.f32 %v445, %v1100
  %v1102 = vpop.f32.mrf.mxu0
  %v1103 = vpop.f32.mrf.mxu0
  %v1104 = vadd.f32 %v448, %v1103
  %v1105 = vpop.f32.mrf.mxu0
  %1106 = vmatprep.mubr.bf16.mxu0 0
  %1107 = vmatmul.mubr.bf16.gmra.mxu0 %v865
  %v1108 = vpop.f32.mrf.mxu0
  %v1109 = vadd.f32 %v453, %v1108
  %v1110 = vpop.f32.mrf.mxu0
  %v1111 = vpop.f32.mrf.mxu0
  %v1112 = vadd.f32 %v456, %v1111
  %v1113 = vpop.f32.mrf.mxu0
  %1114 = vmatprep.mubr.bf16.mxu0 0
  %1115 = vmatmul.mubr.bf16.gmra.mxu0 %v868
  %v1116 = vpop.f32.mrf.mxu0
  %v1117 = vadd.f32 %v461, %v1116
  %v1118 = vpop.f32.mrf.mxu0
  %v1119 = vpop.f32.mrf.mxu0
  %v1120 = vadd.f32 %v464, %v1119
  %v1121 = vpop.f32.mrf.mxu0
  %1122 = vmatprep.mubr.bf16.mxu0 0
  %1123 = vmatmul.mubr.bf16.gmra.mxu0 %v871
  %v1124 = vpop.f32.mrf.mxu0
  %v1125 = vadd.f32 %v469, %v1124
  %v1126 = vpop.f32.mrf.mxu0
  %v1127 = vpop.f32.mrf.mxu0
  %v1128 = vadd.f32 %v472, %v1127
  %v1129 = vpop.f32.mrf.mxu0
  %1130 = vmatprep.mubr.bf16.mxu0 0
  %1131 = vmatmul.mubr.bf16.gmra.mxu0 %v874
  %v1132 = vpop.f32.mrf.mxu0
  %v1133 = vadd.f32 %v477, %v1132
  %v1134 = vpop.f32.mrf.mxu0
  %v1135 = vpop.f32.mrf.mxu0
  %v1136 = vadd.f32 %v480, %v1135
  %v1137 = vpop.f32.mrf.mxu0
  %1138 = vmatprep.mubr.bf16.mxu0 0
  %1139 = vmatmul.mubr.bf16.gmra.mxu0 %v877
  %v1140 = vpop.f32.mrf.mxu0
  %v1141 = vadd.f32 %v485, %v1140
  %v1142 = vpop.f32.mrf.mxu0
  %v1143 = vpop.f32.mrf.mxu0
  %v1144 = vadd.f32 %v488, %v1143
  %v1145 = vpop.f32.mrf.mxu0
  %1146 = vmatprep.mubr.bf16.mxu0 0
  %1147 = vmatmul.mubr.bf16.gmra.mxu0 %v880
  %v1148 = vpop.f32.mrf.mxu0
  %v1149 = vadd.f32 %v493, %v1148
  %v1150 = vpop.f32.mrf.mxu0
  %v1151 = vpop.f32.mrf.mxu0
  %v1152 = vadd.f32 %v496, %v1151
  %v1153 = vpop.f32.mrf.mxu0
  %1154 = vmatprep.mubr.bf16.mxu0 0
  %1155 = vmatmul.mubr.bf16.gmra.mxu0 %v883
  %v1156 = vpop.f32.mrf.mxu0
  %v1157 = vadd.f32 %v501, %v1156
  %v1158 = vpop.f32.mrf.mxu0
  %v1159 = vpop.f32.mrf.mxu0
  %v1160 = vadd.f32 %v504, %v1159
  %v1161 = vpop.f32.mrf.mxu0
  %1162 = vmatprep.mubr.bf16.mxu0 0
  %1163 = vmatmul.mubr.bf16.gmra.mxu0 %v886
  %v1164 = vpop.f32.mrf.mxu0
  %v1165 = vadd.f32 %v509, %v1164
  %v1166 = vpop.f32.mrf.mxu0
  %v1167 = vpop.f32.mrf.mxu0
  %v1168 = vadd.f32 %v512, %v1167
  %v1169 = vpop.f32.mrf.mxu0
  %1170 = vmatprep.mubr.bf16.mxu0 0
  %1171 = vmatmul.mubr.bf16.gmra.mxu0 %v889
  %v1172 = vpop.f32.mrf.mxu0
  %v1173 = vadd.f32 %v517, %v1172
  %v1174 = vpop.f32.mrf.mxu0
  %v1175 = vpop.f32.mrf.mxu0
  %v1176 = vadd.f32 %v520, %v1175
  %v1177 = vpop.f32.mrf.mxu0
  %1178 = vmatprep.mubr.bf16.mxu0 0
  %1179 = vmatmul.mubr.bf16.gmra.mxu0 %v892
  %v1180 = vpop.f32.mrf.mxu0
  %v1181 = vadd.f32 %v525, %v1180
  %v1182 = vpop.f32.mrf.mxu0
  %v1183 = vpop.f32.mrf.mxu0
  %v1184 = vadd.f32 %v528, %v1183
  %v1185 = vpop.f32.mrf.mxu0
  %1186 = vdwg.mxu0
  %v1187 = vld [vmem:[%s4] sm:$0x1]
  %v1189 = vlaneseq
  %v1190 = vshrl.u32 %v1189, 7
  %v1191 = vsub.s32 0, %v1190
  %v1192 = vrot.slane %v1187, %v1191
  %v1194 = vadd.f32 %v933, %v1192
  %v1195 = vadd.f32 %v936, %v1192
  %v1196 = vadd.f32 %v941, %v1192
  %v1197 = vadd.f32 %v944, %v1192
  %v1198 = vadd.f32 %v949, %v1192
  %v1199 = vadd.f32 %v952, %v1192
  %v1200 = vadd.f32 %v957, %v1192
  %v1201 = vadd.f32 %v960, %v1192
  %v1202 = vadd.f32 %v965, %v1192
  %v1203 = vadd.f32 %v968, %v1192
  %v1204 = vadd.f32 %v973, %v1192
  %v1205 = vadd.f32 %v976, %v1192
  %v1206 = vadd.f32 %v981, %v1192
  %v1207 = vadd.f32 %v984, %v1192
  %v1208 = vadd.f32 %v989, %v1192
  %v1209 = vadd.f32 %v992, %v1192
  %v1210 = vadd.f32 %v997, %v1192
  %v1211 = vadd.f32 %v1000, %v1192
  %v1212 = vadd.f32 %v1005, %v1192
  %v1213 = vadd.f32 %v1008, %v1192
  %v1214 = vadd.f32 %v1013, %v1192
  %v1215 = vadd.f32 %v1016, %v1192
  %v1216 = vadd.f32 %v1021, %v1192
  %v1217 = vadd.f32 %v1024, %v1192
  %v1218 = vadd.f32 %v1029, %v1192
  %v1219 = vadd.f32 %v1032, %v1192
  %v1220 = vadd.f32 %v1037, %v1192
  %v1221 = vadd.f32 %v1040, %v1192
  %v1222 = vadd.f32 %v1045, %v1192
  %v1223 = vadd.f32 %v1048, %v1192
  %v1224 = vadd.f32 %v1053, %v1192
  %v1225 = vadd.f32 %v1056, %v1192
  %v1226 = vadd.f32 %v1061, %v1192
  %v1227 = vadd.f32 %v1064, %v1192
  %v1228 = vadd.f32 %v1069, %v1192
  %v1229 = vadd.f32 %v1072, %v1192
  %v1230 = vadd.f32 %v1077, %v1192
  %v1231 = vadd.f32 %v1080, %v1192
  %v1232 = vadd.f32 %v1085, %v1192
  %v1233 = vadd.f32 %v1088, %v1192
  %v1234 = vadd.f32 %v1093, %v1192
  %v1235 = vadd.f32 %v1096, %v1192
  %v1236 = vadd.f32 %v1101, %v1192
  %v1237 = vadd.f32 %v1104, %v1192
  %v1238 = vadd.f32 %v1109, %v1192
  %v1239 = vadd.f32 %v1112, %v1192
  %v1240 = vadd.f32 %v1117, %v1192
  %v1241 = vadd.f32 %v1120, %v1192
  %v1242 = vadd.f32 %v1125, %v1192
  %v1243 = vadd.f32 %v1128, %v1192
  %v1244 = vadd.f32 %v1133, %v1192
  %v1245 = vadd.f32 %v1136, %v1192
  %v1246 = vadd.f32 %v1141, %v1192
  %v1247 = vadd.f32 %v1144, %v1192
  %v1248 = vadd.f32 %v1149, %v1192
  %v1249 = vadd.f32 %v1152, %v1192
  %v1250 = vadd.f32 %v1157, %v1192
  %v1251 = vadd.f32 %v1160, %v1192
  %v1252 = vadd.f32 %v1165, %v1192
  %v1253 = vadd.f32 %v1168, %v1192
  %v1254 = vadd.f32 %v1173, %v1192
  %v1255 = vadd.f32 %v1176, %v1192
  %v1256 = vadd.f32 %v1181, %v1192
  %v1257 = vadd.f32 %v1184, %v1192
  %v1258 = vmax.f32 %v1194, 0.0
  %v1259 = vmax.f32 %v1195, 0.0
  %v1260 = vmax.f32 %v1196, 0.0
  %v1261 = vmax.f32 %v1197, 0.0
  %v1262 = vmax.f32 %v1198, 0.0
  %v1263 = vmax.f32 %v1199, 0.0
  %v1264 = vmax.f32 %v1200, 0.0
  %v1265 = vmax.f32 %v1201, 0.0
  %v1266 = vmax.f32 %v1202, 0.0
  %v1267 = vmax.f32 %v1203, 0.0
  %v1268 = vmax.f32 %v1204, 0.0
  %v1269 = vmax.f32 %v1205, 0.0
  %v1270 = vmax.f32 %v1206, 0.0
  %v1271 = vmax.f32 %v1207, 0.0
  %v1272 = vmax.f32 %v1208, 0.0
  %v1273 = vmax.f32 %v1209, 0.0
  %v1274 = vmax.f32 %v1210, 0.0
  %v1275 = vmax.f32 %v1211, 0.0
  %v1276 = vmax.f32 %v1212, 0.0
  %v1277 = vmax.f32 %v1213, 0.0
  %v1278 = vmax.f32 %v1214, 0.0
  %v1279 = vmax.f32 %v1215, 0.0
  %v1280 = vmax.f32 %v1216, 0.0
  %v1281 = vmax.f32 %v1217, 0.0
  %v1282 = vmax.f32 %v1218, 0.0
  %v1283 = vmax.f32 %v1219, 0.0
  %v1284 = vmax.f32 %v1220, 0.0
  %v1285 = vmax.f32 %v1221, 0.0
  %v1286 = vmax.f32 %v1222, 0.0
  %v1287 = vmax.f32 %v1223, 0.0
  %v1288 = vmax.f32 %v1224, 0.0
  %v1289 = vmax.f32 %v1225, 0.0
  %v1290 = vmax.f32 %v1226, 0.0
  %v1291 = vmax.f32 %v1227, 0.0
  %v1292 = vmax.f32 %v1228, 0.0
  %v1293 = vmax.f32 %v1229, 0.0
  %v1294 = vmax.f32 %v1230, 0.0
  %v1295 = vmax.f32 %v1231, 0.0
  %v1296 = vmax.f32 %v1232, 0.0
  %v1297 = vmax.f32 %v1233, 0.0
  %v1298 = vmax.f32 %v1234, 0.0
  %v1299 = vmax.f32 %v1235, 0.0
  %v1300 = vmax.f32 %v1236, 0.0
  %v1301 = vmax.f32 %v1237, 0.0
  %v1302 = vmax.f32 %v1238, 0.0
  %v1303 = vmax.f32 %v1239, 0.0
  %v1304 = vmax.f32 %v1240, 0.0
  %v1305 = vmax.f32 %v1241, 0.0
  %v1306 = vmax.f32 %v1242, 0.0
  %v1307 = vmax.f32 %v1243, 0.0
  %v1308 = vmax.f32 %v1244, 0.0
  %v1309 = vmax.f32 %v1245, 0.0
  %v1310 = vmax.f32 %v1246, 0.0
  %v1311 = vmax.f32 %v1247, 0.0
  %v1312 = vmax.f32 %v1248, 0.0
  %v1313 = vmax.f32 %v1249, 0.0
  %v1314 = vmax.f32 %v1250, 0.0
  %v1315 = vmax.f32 %v1251, 0.0
  %v1316 = vmax.f32 %v1252, 0.0
  %v1317 = vmax.f32 %v1253, 0.0
  %v1318 = vmax.f32 %v1254, 0.0
  %v1319 = vmax.f32 %v1255, 0.0
  %v1320 = vmax.f32 %v1256, 0.0
  %v1321 = vmax.f32 %v1257, 0.0
  %v1322 = vpack.c.bf16 %v1259, %v1258
  %v1323 = vpack.c.bf16 %v1261, %v1260
  %v1324 = vpack.c.bf16 %v1263, %v1262
  %v1325 = vpack.c.bf16 %v1265, %v1264
  %v1326 = vpack.c.bf16 %v1267, %v1266
  %v1327 = vpack.c.bf16 %v1269, %v1268
  %v1328 = vpack.c.bf16 %v1271, %v1270
  %v1329 = vpack.c.bf16 %v1273, %v1272
  %v1330 = vpack.c.bf16 %v1275, %v1274
  %v1331 = vpack.c.bf16 %v1277, %v1276
  %v1332 = vpack.c.bf16 %v1279, %v1278
  %v1333 = vpack.c.bf16 %v1281, %v1280
  %v1334 = vpack.c.bf16 %v1283, %v1282
  %v1335 = vpack.c.bf16 %v1285, %v1284
  %v1336 = vpack.c.bf16 %v1287, %v1286
  %v1337 = vpack.c.bf16 %v1289, %v1288
  %v1338 = vpack.c.bf16 %v1291, %v1290
  %v1339 = vpack.c.bf16 %v1293, %v1292
  %v1340 = vpack.c.bf16 %v1295, %v1294
  %v1341 = vpack.c.bf16 %v1297, %v1296
  %v1342 = vpack.c.bf16 %v1299, %v1298
  %v1343 = vpack.c.bf16 %v1301, %v1300
  %v1344 = vpack.c.bf16 %v1303, %v1302
  %v1345 = vpack.c.bf16 %v1305, %v1304
  %v1346 = vpack.c.bf16 %v1307, %v1306
  %v1347 = vpack.c.bf16 %v1309, %v1308
  %v1348 = vpack.c.bf16 %v1311, %v1310
  %v1349 = vpack.c.bf16 %v1313, %v1312
  %v1350 = vpack.c.bf16 %v1315, %v1314
  %v1351 = vpack.c.bf16 %v1317, %v1316
  %v1352 = vpack.c.bf16 %v1319, %v1318
  %v1353 = vpack.c.bf16 %v1321, %v1320
  %v1354 = vld [vmem:[%s5] sm:$0xf]
  %v1355 = vld [vmem:[%s5 + $0x4] sm:$0xf]
  %v1356 = vld [vmem:[%s5 + $0x8] sm:$0xf]
  %v1357 = vld [vmem:[%s5 + $0xc] sm:$0xf]
  %v1358 = vld [vmem:[%s6] sm:$0x1]
  %v1360 = vlaneseq
  %v1361 = vshrl.u32 %v1360, 7
  %v1362 = vsub.s32 0, %v1361
  %v1363 = vrot.slane %v1358, %v1362
  %v1369 = vunpack.c.l.b16 %v1354
  %v1370 = vunpack.c.l.b16 %v1355
  %v1371 = vunpack.c.l.b16 %v1356
  %v1372 = vunpack.c.l.b16 %v1357
  %v1373 = vpack.c.b16 %v1370, %v1369
  %v1374 = vpack.c.b16 %v1372, %v1371
  %vm1377 = vcmask 261120
  %v1379 = vsel %vm1377, %v1322, 0
  %v1382 = vsel %vm1377, %v1323, 0
  %v1385 = vsel %vm1377, %v1324, 0
  %v1388 = vsel %vm1377, %v1325, 0
  %v1391 = vsel %vm1377, %v1326, 0
  %v1394 = vsel %vm1377, %v1327, 0
  %v1397 = vsel %vm1377, %v1328, 0
  %v1400 = vsel %vm1377, %v1329, 0
  %v1403 = vsel %vm1377, %v1330, 0
  %v1406 = vsel %vm1377, %v1331, 0
  %v1409 = vsel %vm1377, %v1332, 0
  %v1412 = vsel %vm1377, %v1333, 0
  %v1415 = vsel %vm1377, %v1334, 0
  %v1418 = vsel %vm1377, %v1335, 0
  %v1421 = vsel %vm1377, %v1336, 0
  %v1424 = vsel %vm1377, %v1337, 0
  %v1427 = vsel %vm1377, %v1338, 0
  %v1430 = vsel %vm1377, %v1339, 0
  %v1433 = vsel %vm1377, %v1340, 0
  %v1436 = vsel %vm1377, %v1341, 0
  %v1439 = vsel %vm1377, %v1342, 0
  %v1442 = vsel %vm1377, %v1343, 0
  %v1445 = vsel %vm1377, %v1344, 0
  %v1448 = vsel %vm1377, %v1345, 0
  %v1451 = vsel %vm1377, %v1346, 0
  %v1454 = vsel %vm1377, %v1347, 0
  %v1457 = vsel %vm1377, %v1348, 0
  %v1460 = vsel %vm1377, %v1349, 0
  %v1463 = vsel %vm1377, %v1350, 0
  %v1466 = vsel %vm1377, %v1351, 0
  %v1469 = vsel %vm1377, %v1352, 0
  %v1472 = vsel %vm1377, %v1353, 0
  %1474 = vmatprep.subr.bf16.mxu0 0
  %1475 = vmatpush1.bf16.msra.mxu0 0
  %1476 = vmatprep.subr.bf16.mxu0 0
  %1477 = vmatpush1.bf16.msra.mxu0 0
  %1478 = vmatprep.subr.bf16.mxu0 0
  %1479 = vmatpush1.bf16.msra.mxu0 0
  %1480 = vmatprep.subr.bf16.mxu0 0
  %1481 = vmatpush1.bf16.msra.mxu0 0
  %1482 = vmatprep.subr.bf16.mxu0 0
  %1483 = vmatpush1.bf16.msra.mxu0 0
  %1484 = vmatprep.subr.bf16.mxu0 0
  %1485 = vmatpush1.bf16.msra.mxu0 0
  %1486 = vmatprep.subr.bf16.mxu0 0
  %1487 = vmatpush1.bf16.msra.mxu0 %v1374
  %1488 = vmatprep.subr.bf16.mxu0 0
  %1489 = vmatpush1.bf16.msra.mxu0 %v1373
  %1490 = vmatprep.subr.bf16.mxu0 0
  %1491 = vmatpush2.bf16.msra.mxu0 0
  %1492 = vmatprep.subr.bf16.mxu0 0
  %1493 = vmatpush2.bf16.msra.mxu0 0
  %1494 = vmatprep.subr.bf16.mxu0 0
  %1495 = vmatpush2.bf16.msra.mxu0 0
  %1496 = vmatprep.subr.bf16.mxu0 0
  %1497 = vmatpush2.bf16.msra.mxu0 0
  %1498 = vmatprep.subr.bf16.mxu0 0
  %1499 = vmatpush2.bf16.msra.mxu0 0
  %1500 = vmatprep.subr.bf16.mxu0 0
  %1501 = vmatpush2.bf16.msra.mxu0 0
  %1502 = vmatprep.subr.bf16.mxu0 0
  %1503 = vmatpush2.bf16.msra.mxu0 0
  %1504 = vmatprep.subr.bf16.mxu0 0
  %1505 = vmatpush2.bf16.msra.mxu0 0
  %1506 = vmatprep.mubr.bf16.mxu0 0
  %1507 = vmatmul.mubr.bf16.gmra.mxu0 %v1379
  %v1508 = vpop.f32.mrf.mxu0
  %v1509 = vadd.f32 %v1363, %v1508
  %v1510 = vpop.f32.mrf.mxu0
  %v1511 = vpop.f32.mrf.mxu0
  %v1512 = vadd.f32 %v1363, %v1511
  %v1513 = vpop.f32.mrf.mxu0
  %1514 = vmatprep.mubr.bf16.mxu0 0
  %1515 = vmatmul.mubr.bf16.gmra.mxu0 %v1382
  %v1516 = vpop.f32.mrf.mxu0
  %v1517 = vadd.f32 %v1363, %v1516
  %v1518 = vpop.f32.mrf.mxu0
  %v1519 = vpop.f32.mrf.mxu0
  %v1520 = vadd.f32 %v1363, %v1519
  %v1521 = vpop.f32.mrf.mxu0
  %1522 = vmatprep.mubr.bf16.mxu0 0
  %1523 = vmatmul.mubr.bf16.gmra.mxu0 %v1385
  %v1524 = vpop.f32.mrf.mxu0
  %v1525 = vadd.f32 %v1363, %v1524
  %v1526 = vpop.f32.mrf.mxu0
  %v1527 = vpop.f32.mrf.mxu0
  %v1528 = vadd.f32 %v1363, %v1527
  %v1529 = vpop.f32.mrf.mxu0
  %1530 = vmatprep.mubr.bf16.mxu0 0
  %1531 = vmatmul.mubr.bf16.gmra.mxu0 %v1388
  %v1532 = vpop.f32.mrf.mxu0
  %v1533 = vadd.f32 %v1363, %v1532
  %v1534 = vpop.f32.mrf.mxu0
  %v1535 = vpop.f32.mrf.mxu0
  %v1536 = vadd.f32 %v1363, %v1535
  %v1537 = vpop.f32.mrf.mxu0
  %1538 = vmatprep.mubr.bf16.mxu0 0
  %1539 = vmatmul.mubr.bf16.gmra.mxu0 %v1391
  %v1540 = vpop.f32.mrf.mxu0
  %v1541 = vadd.f32 %v1363, %v1540
  %v1542 = vpop.f32.mrf.mxu0
  %v1543 = vpop.f32.mrf.mxu0
  %v1544 = vadd.f32 %v1363, %v1543
  %v1545 = vpop.f32.mrf.mxu0
  %1546 = vmatprep.mubr.bf16.mxu0 0
  %1547 = vmatmul.mubr.bf16.gmra.mxu0 %v1394
  %v1548 = vpop.f32.mrf.mxu0
  %v1549 = vadd.f32 %v1363, %v1548
  %v1550 = vpop.f32.mrf.mxu0
  %v1551 = vpop.f32.mrf.mxu0
  %v1552 = vadd.f32 %v1363, %v1551
  %v1553 = vpop.f32.mrf.mxu0
  %1554 = vmatprep.mubr.bf16.mxu0 0
  %1555 = vmatmul.mubr.bf16.gmra.mxu0 %v1397
  %v1556 = vpop.f32.mrf.mxu0
  %v1557 = vadd.f32 %v1363, %v1556
  %v1558 = vpop.f32.mrf.mxu0
  %v1559 = vpop.f32.mrf.mxu0
  %v1560 = vadd.f32 %v1363, %v1559
  %v1561 = vpop.f32.mrf.mxu0
  %1562 = vmatprep.mubr.bf16.mxu0 0
  %1563 = vmatmul.mubr.bf16.gmra.mxu0 %v1400
  %v1564 = vpop.f32.mrf.mxu0
  %v1565 = vadd.f32 %v1363, %v1564
  %v1566 = vpop.f32.mrf.mxu0
  %v1567 = vpop.f32.mrf.mxu0
  %v1568 = vadd.f32 %v1363, %v1567
  %v1569 = vpop.f32.mrf.mxu0
  %1570 = vmatprep.mubr.bf16.mxu0 0
  %1571 = vmatmul.mubr.bf16.gmra.mxu0 %v1403
  %v1572 = vpop.f32.mrf.mxu0
  %v1573 = vadd.f32 %v1363, %v1572
  %v1574 = vpop.f32.mrf.mxu0
  %v1575 = vpop.f32.mrf.mxu0
  %v1576 = vadd.f32 %v1363, %v1575
  %v1577 = vpop.f32.mrf.mxu0
  %1578 = vmatprep.mubr.bf16.mxu0 0
  %1579 = vmatmul.mubr.bf16.gmra.mxu0 %v1406
  %v1580 = vpop.f32.mrf.mxu0
  %v1581 = vadd.f32 %v1363, %v1580
  %v1582 = vpop.f32.mrf.mxu0
  %v1583 = vpop.f32.mrf.mxu0
  %v1584 = vadd.f32 %v1363, %v1583
  %v1585 = vpop.f32.mrf.mxu0
  %1586 = vmatprep.mubr.bf16.mxu0 0
  %1587 = vmatmul.mubr.bf16.gmra.mxu0 %v1409
  %v1588 = vpop.f32.mrf.mxu0
  %v1589 = vadd.f32 %v1363, %v1588
  %v1590 = vpop.f32.mrf.mxu0
  %v1591 = vpop.f32.mrf.mxu0
  %v1592 = vadd.f32 %v1363, %v1591
  %v1593 = vpop.f32.mrf.mxu0
  %1594 = vmatprep.mubr.bf16.mxu0 0
  %1595 = vmatmul.mubr.bf16.gmra.mxu0 %v1412
  %v1596 = vpop.f32.mrf.mxu0
  %v1597 = vadd.f32 %v1363, %v1596
  %v1598 = vpop.f32.mrf.mxu0
  %v1599 = vpop.f32.mrf.mxu0
  %v1600 = vadd.f32 %v1363, %v1599
  %v1601 = vpop.f32.mrf.mxu0
  %1602 = vmatprep.mubr.bf16.mxu0 0
  %1603 = vmatmul.mubr.bf16.gmra.mxu0 %v1415
  %v1604 = vpop.f32.mrf.mxu0
  %v1605 = vadd.f32 %v1363, %v1604
  %v1606 = vpop.f32.mrf.mxu0
  %v1607 = vpop.f32.mrf.mxu0
  %v1608 = vadd.f32 %v1363, %v1607
  %v1609 = vpop.f32.mrf.mxu0
  %1610 = vmatprep.mubr.bf16.mxu0 0
  %1611 = vmatmul.mubr.bf16.gmra.mxu0 %v1418
  %v1612 = vpop.f32.mrf.mxu0
  %v1613 = vadd.f32 %v1363, %v1612
  %v1614 = vpop.f32.mrf.mxu0
  %v1615 = vpop.f32.mrf.mxu0
  %v1616 = vadd.f32 %v1363, %v1615
  %v1617 = vpop.f32.mrf.mxu0
  %1618 = vmatprep.mubr.bf16.mxu0 0
  %1619 = vmatmul.mubr.bf16.gmra.mxu0 %v1421
  %v1620 = vpop.f32.mrf.mxu0
  %v1621 = vadd.f32 %v1363, %v1620
  %v1622 = vpop.f32.mrf.mxu0
  %v1623 = vpop.f32.mrf.mxu0
  %v1624 = vadd.f32 %v1363, %v1623
  %v1625 = vpop.f32.mrf.mxu0
  %1626 = vmatprep.mubr.bf16.mxu0 0
  %1627 = vmatmul.mubr.bf16.gmra.mxu0 %v1424
  %v1628 = vpop.f32.mrf.mxu0
  %v1629 = vadd.f32 %v1363, %v1628
  %v1630 = vpop.f32.mrf.mxu0
  %v1631 = vpop.f32.mrf.mxu0
  %v1632 = vadd.f32 %v1363, %v1631
  %v1633 = vpop.f32.mrf.mxu0
  %1634 = vmatprep.mubr.bf16.mxu0 0
  %1635 = vmatmul.mubr.bf16.gmra.mxu0 %v1427
  %v1636 = vpop.f32.mrf.mxu0
  %v1637 = vadd.f32 %v1363, %v1636
  %v1638 = vpop.f32.mrf.mxu0
  %v1639 = vpop.f32.mrf.mxu0
  %v1640 = vadd.f32 %v1363, %v1639
  %v1641 = vpop.f32.mrf.mxu0
  %1642 = vmatprep.mubr.bf16.mxu0 0
  %1643 = vmatmul.mubr.bf16.gmra.mxu0 %v1430
  %v1644 = vpop.f32.mrf.mxu0
  %v1645 = vadd.f32 %v1363, %v1644
  %v1646 = vpop.f32.mrf.mxu0
  %v1647 = vpop.f32.mrf.mxu0
  %v1648 = vadd.f32 %v1363, %v1647
  %v1649 = vpop.f32.mrf.mxu0
  %1650 = vmatprep.mubr.bf16.mxu0 0
  %1651 = vmatmul.mubr.bf16.gmra.mxu0 %v1433
  %v1652 = vpop.f32.mrf.mxu0
  %v1653 = vadd.f32 %v1363, %v1652
  %v1654 = vpop.f32.mrf.mxu0
  %v1655 = vpop.f32.mrf.mxu0
  %v1656 = vadd.f32 %v1363, %v1655
  %v1657 = vpop.f32.mrf.mxu0
  %1658 = vmatprep.mubr.bf16.mxu0 0
  %1659 = vmatmul.mubr.bf16.gmra.mxu0 %v1436
  %v1660 = vpop.f32.mrf.mxu0
  %v1661 = vadd.f32 %v1363, %v1660
  %v1662 = vpop.f32.mrf.mxu0
  %v1663 = vpop.f32.mrf.mxu0
  %v1664 = vadd.f32 %v1363, %v1663
  %v1665 = vpop.f32.mrf.mxu0
  %1666 = vmatprep.mubr.bf16.mxu0 0
  %1667 = vmatmul.mubr.bf16.gmra.mxu0 %v1439
  %v1668 = vpop.f32.mrf.mxu0
  %v1669 = vadd.f32 %v1363, %v1668
  %v1670 = vpop.f32.mrf.mxu0
  %v1671 = vpop.f32.mrf.mxu0
  %v1672 = vadd.f32 %v1363, %v1671
  %v1673 = vpop.f32.mrf.mxu0
  %1674 = vmatprep.mubr.bf16.mxu0 0
  %1675 = vmatmul.mubr.bf16.gmra.mxu0 %v1442
  %v1676 = vpop.f32.mrf.mxu0
  %v1677 = vadd.f32 %v1363, %v1676
  %v1678 = vpop.f32.mrf.mxu0
  %v1679 = vpop.f32.mrf.mxu0
  %v1680 = vadd.f32 %v1363, %v1679
  %v1681 = vpop.f32.mrf.mxu0
  %1682 = vmatprep.mubr.bf16.mxu0 0
  %1683 = vmatmul.mubr.bf16.gmra.mxu0 %v1445
  %v1684 = vpop.f32.mrf.mxu0
  %v1685 = vadd.f32 %v1363, %v1684
  %v1686 = vpop.f32.mrf.mxu0
  %v1687 = vpop.f32.mrf.mxu0
  %v1688 = vadd.f32 %v1363, %v1687
  %v1689 = vpop.f32.mrf.mxu0
  %1690 = vmatprep.mubr.bf16.mxu0 0
  %1691 = vmatmul.mubr.bf16.gmra.mxu0 %v1448
  %v1692 = vpop.f32.mrf.mxu0
  %v1693 = vadd.f32 %v1363, %v1692
  %v1694 = vpop.f32.mrf.mxu0
  %v1695 = vpop.f32.mrf.mxu0
  %v1696 = vadd.f32 %v1363, %v1695
  %v1697 = vpop.f32.mrf.mxu0
  %1698 = vmatprep.mubr.bf16.mxu0 0
  %1699 = vmatmul.mubr.bf16.gmra.mxu0 %v1451
  %v1700 = vpop.f32.mrf.mxu0
  %v1701 = vadd.f32 %v1363, %v1700
  %v1702 = vpop.f32.mrf.mxu0
  %v1703 = vpop.f32.mrf.mxu0
  %v1704 = vadd.f32 %v1363, %v1703
  %v1705 = vpop.f32.mrf.mxu0
  %1706 = vmatprep.mubr.bf16.mxu0 0
  %1707 = vmatmul.mubr.bf16.gmra.mxu0 %v1454
  %v1708 = vpop.f32.mrf.mxu0
  %v1709 = vadd.f32 %v1363, %v1708
  %v1710 = vpop.f32.mrf.mxu0
  %v1711 = vpop.f32.mrf.mxu0
  %v1712 = vadd.f32 %v1363, %v1711
  %v1713 = vpop.f32.mrf.mxu0
  %1714 = vmatprep.mubr.bf16.mxu0 0
  %1715 = vmatmul.mubr.bf16.gmra.mxu0 %v1457
  %v1716 = vpop.f32.mrf.mxu0
  %v1717 = vadd.f32 %v1363, %v1716
  %v1718 = vpop.f32.mrf.mxu0
  %v1719 = vpop.f32.mrf.mxu0
  %v1720 = vadd.f32 %v1363, %v1719
  %v1721 = vpop.f32.mrf.mxu0
  %1722 = vmatprep.mubr.bf16.mxu0 0
  %1723 = vmatmul.mubr.bf16.gmra.mxu0 %v1460
  %v1724 = vpop.f32.mrf.mxu0
  %v1725 = vadd.f32 %v1363, %v1724
  %v1726 = vpop.f32.mrf.mxu0
  %v1727 = vpop.f32.mrf.mxu0
  %v1728 = vadd.f32 %v1363, %v1727
  %v1729 = vpop.f32.mrf.mxu0
  %1730 = vmatprep.mubr.bf16.mxu0 0
  %1731 = vmatmul.mubr.bf16.gmra.mxu0 %v1463
  %v1732 = vpop.f32.mrf.mxu0
  %v1733 = vadd.f32 %v1363, %v1732
  %v1734 = vpop.f32.mrf.mxu0
  %v1735 = vpop.f32.mrf.mxu0
  %v1736 = vadd.f32 %v1363, %v1735
  %v1737 = vpop.f32.mrf.mxu0
  %1738 = vmatprep.mubr.bf16.mxu0 0
  %1739 = vmatmul.mubr.bf16.gmra.mxu0 %v1466
  %v1740 = vpop.f32.mrf.mxu0
  %v1741 = vadd.f32 %v1363, %v1740
  %v1742 = vpop.f32.mrf.mxu0
  %v1743 = vpop.f32.mrf.mxu0
  %v1744 = vadd.f32 %v1363, %v1743
  %v1745 = vpop.f32.mrf.mxu0
  %1746 = vmatprep.mubr.bf16.mxu0 0
  %1747 = vmatmul.mubr.bf16.gmra.mxu0 %v1469
  %v1748 = vpop.f32.mrf.mxu0
  %v1749 = vadd.f32 %v1363, %v1748
  %v1750 = vpop.f32.mrf.mxu0
  %v1751 = vpop.f32.mrf.mxu0
  %v1752 = vadd.f32 %v1363, %v1751
  %v1753 = vpop.f32.mrf.mxu0
  %1754 = vmatprep.mubr.bf16.mxu0 0
  %1755 = vmatmul.mubr.bf16.gmra.mxu0 %v1472
  %v1756 = vpop.f32.mrf.mxu0
  %v1757 = vadd.f32 %v1363, %v1756
  %v1758 = vpop.f32.mrf.mxu0
  %v1759 = vpop.f32.mrf.mxu0
  %v1760 = vadd.f32 %v1363, %v1759
  %v1761 = vpop.f32.mrf.mxu0
  %1762 = vdwg.mxu0
  %v1763 = vmax.f32 %v1509, 0.0
  %v1764 = vmax.f32 %v1512, 0.0
  %v1765 = vmax.f32 %v1517, 0.0
  %v1766 = vmax.f32 %v1520, 0.0
  %v1767 = vmax.f32 %v1525, 0.0
  %v1768 = vmax.f32 %v1528, 0.0
  %v1769 = vmax.f32 %v1533, 0.0
  %v1770 = vmax.f32 %v1536, 0.0
  %v1771 = vmax.f32 %v1541, 0.0
  %v1772 = vmax.f32 %v1544, 0.0
  %v1773 = vmax.f32 %v1549, 0.0
  %v1774 = vmax.f32 %v1552, 0.0
  %v1775 = vmax.f32 %v1557, 0.0
  %v1776 = vmax.f32 %v1560, 0.0
  %v1777 = vmax.f32 %v1565, 0.0
  %v1778 = vmax.f32 %v1568, 0.0
  %v1779 = vmax.f32 %v1573, 0.0
  %v1780 = vmax.f32 %v1576, 0.0
  %v1781 = vmax.f32 %v1581, 0.0
  %v1782 = vmax.f32 %v1584, 0.0
  %v1783 = vmax.f32 %v1589, 0.0
  %v1784 = vmax.f32 %v1592, 0.0
  %v1785 = vmax.f32 %v1597, 0.0
  %v1786 = vmax.f32 %v1600, 0.0
  %v1787 = vmax.f32 %v1605, 0.0
  %v1788 = vmax.f32 %v1608, 0.0
  %v1789 = vmax.f32 %v1613, 0.0
  %v1790 = vmax.f32 %v1616, 0.0
  %v1791 = vmax.f32 %v1621, 0.0
  %v1792 = vmax.f32 %v1624, 0.0
  %v1793 = vmax.f32 %v1629, 0.0
  %v1794 = vmax.f32 %v1632, 0.0
  %v1795 = vmax.f32 %v1637, 0.0
  %v1796 = vmax.f32 %v1640, 0.0
  %v1797 = vmax.f32 %v1645, 0.0
  %v1798 = vmax.f32 %v1648, 0.0
  %v1799 = vmax.f32 %v1653, 0.0
  %v1800 = vmax.f32 %v1656, 0.0
  %v1801 = vmax.f32 %v1661, 0.0
  %v1802 = vmax.f32 %v1664, 0.0
  %v1803 = vmax.f32 %v1669, 0.0
  %v1804 = vmax.f32 %v1672, 0.0
  %v1805 = vmax.f32 %v1677, 0.0
  %v1806 = vmax.f32 %v1680, 0.0
  %v1807 = vmax.f32 %v1685, 0.0
  %v1808 = vmax.f32 %v1688, 0.0
  %v1809 = vmax.f32 %v1693, 0.0
  %v1810 = vmax.f32 %v1696, 0.0
  %v1811 = vmax.f32 %v1701, 0.0
  %v1812 = vmax.f32 %v1704, 0.0
  %v1813 = vmax.f32 %v1709, 0.0
  %v1814 = vmax.f32 %v1712, 0.0
  %v1815 = vmax.f32 %v1717, 0.0
  %v1816 = vmax.f32 %v1720, 0.0
  %v1817 = vmax.f32 %v1725, 0.0
  %v1818 = vmax.f32 %v1728, 0.0
  %v1819 = vmax.f32 %v1733, 0.0
  %v1820 = vmax.f32 %v1736, 0.0
  %v1821 = vmax.f32 %v1741, 0.0
  %v1822 = vmax.f32 %v1744, 0.0
  %v1823 = vmax.f32 %v1749, 0.0
  %v1824 = vmax.f32 %v1752, 0.0
  %v1825 = vmax.f32 %v1757, 0.0
  %v1826 = vmax.f32 %v1760, 0.0
  %v1827 = vpack.c.bf16 %v1764, %v1763
  %v1828 = vpack.c.bf16 %v1766, %v1765
  %v1829 = vpack.c.bf16 %v1768, %v1767
  %v1830 = vpack.c.bf16 %v1770, %v1769
  %v1831 = vpack.c.bf16 %v1772, %v1771
  %v1832 = vpack.c.bf16 %v1774, %v1773
  %v1833 = vpack.c.bf16 %v1776, %v1775
  %v1834 = vpack.c.bf16 %v1778, %v1777
  %v1835 = vpack.c.bf16 %v1780, %v1779
  %v1836 = vpack.c.bf16 %v1782, %v1781
  %v1837 = vpack.c.bf16 %v1784, %v1783
  %v1838 = vpack.c.bf16 %v1786, %v1785
  %v1839 = vpack.c.bf16 %v1788, %v1787
  %v1840 = vpack.c.bf16 %v1790, %v1789
  %v1841 = vpack.c.bf16 %v1792, %v1791
  %v1842 = vpack.c.bf16 %v1794, %v1793
  %v1843 = vpack.c.bf16 %v1796, %v1795
  %v1844 = vpack.c.bf16 %v1798, %v1797
  %v1845 = vpack.c.bf16 %v1800, %v1799
  %v1846 = vpack.c.bf16 %v1802, %v1801
  %v1847 = vpack.c.bf16 %v1804, %v1803
  %v1848 = vpack.c.bf16 %v1806, %v1805
  %v1849 = vpack.c.bf16 %v1808, %v1807
  %v1850 = vpack.c.bf16 %v1810, %v1809
  %v1851 = vpack.c.bf16 %v1812, %v1811
  %v1852 = vpack.c.bf16 %v1814, %v1813
  %v1853 = vpack.c.bf16 %v1816, %v1815
  %v1854 = vpack.c.bf16 %v1818, %v1817
  %v1855 = vpack.c.bf16 %v1820, %v1819
  %v1856 = vpack.c.bf16 %v1822, %v1821
  %v1857 = vpack.c.bf16 %v1824, %v1823
  %v1858 = vpack.c.bf16 %v1826, %v1825
  %v1859 = vld [vmem:[%s7] sm:$0xf]
  %v1860 = vld [vmem:[%s7 + $0x4] sm:$0xf]
  %v1861 = vld [vmem:[%s7 + $0x8] sm:$0xf]
  %v1862 = vld [vmem:[%s7 + $0xc] sm:$0xf]
  %v1863 = vld [vmem:[%s8] sm:$0x1]
  %v1865 = vlaneseq
  %v1866 = vshrl.u32 %v1865, 7
  %v1867 = vsub.s32 0, %v1866
  %v1868 = vrot.slane %v1863, %v1867
  %v1874 = vunpack.c.l.b16 %v1859
  %v1875 = vunpack.c.l.b16 %v1860
  %v1876 = vunpack.c.l.b16 %v1861
  %v1877 = vunpack.c.l.b16 %v1862
  %v1878 = vpack.c.b16 %v1875, %v1874
  %v1879 = vpack.c.b16 %v1877, %v1876
  %v1883 = vsel %vm1377, %v1827, 0
  %v1886 = vsel %vm1377, %v1828, 0
  %v1889 = vsel %vm1377, %v1829, 0
  %v1892 = vsel %vm1377, %v1830, 0
  %v1895 = vsel %vm1377, %v1831, 0
  %v1898 = vsel %vm1377, %v1832, 0
  %v1901 = vsel %vm1377, %v1833, 0
  %v1904 = vsel %vm1377, %v1834, 0
  %v1907 = vsel %vm1377, %v1835, 0
  %v1910 = vsel %vm1377, %v1836, 0
  %v1913 = vsel %vm1377, %v1837, 0
  %v1916 = vsel %vm1377, %v1838, 0
  %v1919 = vsel %vm1377, %v1839, 0
  %v1922 = vsel %vm1377, %v1840, 0
  %v1925 = vsel %vm1377, %v1841, 0
  %v1928 = vsel %vm1377, %v1842, 0
  %v1931 = vsel %vm1377, %v1843, 0
  %v1934 = vsel %vm1377, %v1844, 0
  %v1937 = vsel %vm1377, %v1845, 0
  %v1940 = vsel %vm1377, %v1846, 0
  %v1943 = vsel %vm1377, %v1847, 0
  %v1946 = vsel %vm1377, %v1848, 0
  %v1949 = vsel %vm1377, %v1849, 0
  %v1952 = vsel %vm1377, %v1850, 0
  %v1955 = vsel %vm1377, %v1851, 0
  %v1958 = vsel %vm1377, %v1852, 0
  %v1961 = vsel %vm1377, %v1853, 0
  %v1964 = vsel %vm1377, %v1854, 0
  %v1967 = vsel %vm1377, %v1855, 0
  %v1970 = vsel %vm1377, %v1856, 0
  %v1973 = vsel %vm1377, %v1857, 0
  %v1976 = vsel %vm1377, %v1858, 0
  %1978 = vmatprep.subr.bf16.mxu0 0
  %1979 = vmatpush1.bf16.msra.mxu0 0
  %1980 = vmatprep.subr.bf16.mxu0 0
  %1981 = vmatpush1.bf16.msra.mxu0 0
  %1982 = vmatprep.subr.bf16.mxu0 0
  %1983 = vmatpush1.bf16.msra.mxu0 0
  %1984 = vmatprep.subr.bf16.mxu0 0
  %1985 = vmatpush1.bf16.msra.mxu0 0
  %1986 = vmatprep.subr.bf16.mxu0 0
  %1987 = vmatpush1.bf16.msra.mxu0 0
  %1988 = vmatprep.subr.bf16.mxu0 0
  %1989 = vmatpush1.bf16.msra.mxu0 0
  %1990 = vmatprep.subr.bf16.mxu0 0
  %1991 = vmatpush1.bf16.msra.mxu0 %v1879
  %1992 = vmatprep.subr.bf16.mxu0 0
  %1993 = vmatpush1.bf16.msra.mxu0 %v1878
  %1994 = vmatprep.subr.bf16.mxu0 0
  %1995 = vmatpush2.bf16.msra.mxu0 0
  %1996 = vmatprep.subr.bf16.mxu0 0
  %1997 = vmatpush2.bf16.msra.mxu0 0
  %1998 = vmatprep.subr.bf16.mxu0 0
  %1999 = vmatpush2.bf16.msra.mxu0 0
  %2000 = vmatprep.subr.bf16.mxu0 0
  %2001 = vmatpush2.bf16.msra.mxu0 0
  %2002 = vmatprep.subr.bf16.mxu0 0
  %2003 = vmatpush2.bf16.msra.mxu0 0
  %2004 = vmatprep.subr.bf16.mxu0 0
  %2005 = vmatpush2.bf16.msra.mxu0 0
  %2006 = vmatprep.subr.bf16.mxu0 0
  %2007 = vmatpush2.bf16.msra.mxu0 0
  %2008 = vmatprep.subr.bf16.mxu0 0
  %2009 = vmatpush2.bf16.msra.mxu0 0
  %2010 = vmatprep.mubr.bf16.mxu0 0
  %2011 = vmatmul.mubr.bf16.gmra.mxu0 %v1883
  %v2012 = vpop.f32.mrf.mxu0
  %v2013 = vadd.f32 %v1868, %v2012
  %v2014 = vpop.f32.mrf.mxu0
  %v2015 = vpop.f32.mrf.mxu0
  %v2016 = vadd.f32 %v1868, %v2015
  %v2017 = vpop.f32.mrf.mxu0
  %2018 = vmatprep.mubr.bf16.mxu0 0
  %2019 = vmatmul.mubr.bf16.gmra.mxu0 %v1886
  %v2020 = vpop.f32.mrf.mxu0
  %v2021 = vadd.f32 %v1868, %v2020
  %v2022 = vpop.f32.mrf.mxu0
  %v2023 = vpop.f32.mrf.mxu0
  %v2024 = vadd.f32 %v1868, %v2023
  %v2025 = vpop.f32.mrf.mxu0
  %2026 = vmatprep.mubr.bf16.mxu0 0
  %2027 = vmatmul.mubr.bf16.gmra.mxu0 %v1889
  %v2028 = vpop.f32.mrf.mxu0
  %v2029 = vadd.f32 %v1868, %v2028
  %v2030 = vpop.f32.mrf.mxu0
  %v2031 = vpop.f32.mrf.mxu0
  %v2032 = vadd.f32 %v1868, %v2031
  %v2033 = vpop.f32.mrf.mxu0
  %2034 = vmatprep.mubr.bf16.mxu0 0
  %2035 = vmatmul.mubr.bf16.gmra.mxu0 %v1892
  %v2036 = vpop.f32.mrf.mxu0
  %v2037 = vadd.f32 %v1868, %v2036
  %v2038 = vpop.f32.mrf.mxu0
  %v2039 = vpop.f32.mrf.mxu0
  %v2040 = vadd.f32 %v1868, %v2039
  %v2041 = vpop.f32.mrf.mxu0
  %2042 = vmatprep.mubr.bf16.mxu0 0
  %2043 = vmatmul.mubr.bf16.gmra.mxu0 %v1895
  %v2044 = vpop.f32.mrf.mxu0
  %v2045 = vadd.f32 %v1868, %v2044
  %v2046 = vpop.f32.mrf.mxu0
  %v2047 = vpop.f32.mrf.mxu0
  %v2048 = vadd.f32 %v1868, %v2047
  %v2049 = vpop.f32.mrf.mxu0
  %2050 = vmatprep.mubr.bf16.mxu0 0
  %2051 = vmatmul.mubr.bf16.gmra.mxu0 %v1898
  %v2052 = vpop.f32.mrf.mxu0
  %v2053 = vadd.f32 %v1868, %v2052
  %v2054 = vpop.f32.mrf.mxu0
  %v2055 = vpop.f32.mrf.mxu0
  %v2056 = vadd.f32 %v1868, %v2055
  %v2057 = vpop.f32.mrf.mxu0
  %2058 = vmatprep.mubr.bf16.mxu0 0
  %2059 = vmatmul.mubr.bf16.gmra.mxu0 %v1901
  %v2060 = vpop.f32.mrf.mxu0
  %v2061 = vadd.f32 %v1868, %v2060
  %v2062 = vpop.f32.mrf.mxu0
  %v2063 = vpop.f32.mrf.mxu0
  %v2064 = vadd.f32 %v1868, %v2063
  %v2065 = vpop.f32.mrf.mxu0
  %2066 = vmatprep.mubr.bf16.mxu0 0
  %2067 = vmatmul.mubr.bf16.gmra.mxu0 %v1904
  %v2068 = vpop.f32.mrf.mxu0
  %v2069 = vadd.f32 %v1868, %v2068
  %v2070 = vpop.f32.mrf.mxu0
  %v2071 = vpop.f32.mrf.mxu0
  %v2072 = vadd.f32 %v1868, %v2071
  %v2073 = vpop.f32.mrf.mxu0
  %2074 = vmatprep.mubr.bf16.mxu0 0
  %2075 = vmatmul.mubr.bf16.gmra.mxu0 %v1907
  %v2076 = vpop.f32.mrf.mxu0
  %v2077 = vadd.f32 %v1868, %v2076
  %v2078 = vpop.f32.mrf.mxu0
  %v2079 = vpop.f32.mrf.mxu0
  %v2080 = vadd.f32 %v1868, %v2079
  %v2081 = vpop.f32.mrf.mxu0
  %2082 = vmatprep.mubr.bf16.mxu0 0
  %2083 = vmatmul.mubr.bf16.gmra.mxu0 %v1910
  %v2084 = vpop.f32.mrf.mxu0
  %v2085 = vadd.f32 %v1868, %v2084
  %v2086 = vpop.f32.mrf.mxu0
  %v2087 = vpop.f32.mrf.mxu0
  %v2088 = vadd.f32 %v1868, %v2087
  %v2089 = vpop.f32.mrf.mxu0
  %2090 = vmatprep.mubr.bf16.mxu0 0
  %2091 = vmatmul.mubr.bf16.gmra.mxu0 %v1913
  %v2092 = vpop.f32.mrf.mxu0
  %v2093 = vadd.f32 %v1868, %v2092
  %v2094 = vpop.f32.mrf.mxu0
  %v2095 = vpop.f32.mrf.mxu0
  %v2096 = vadd.f32 %v1868, %v2095
  %v2097 = vpop.f32.mrf.mxu0
  %2098 = vmatprep.mubr.bf16.mxu0 0
  %2099 = vmatmul.mubr.bf16.gmra.mxu0 %v1916
  %v2100 = vpop.f32.mrf.mxu0
  %v2101 = vadd.f32 %v1868, %v2100
  %v2102 = vpop.f32.mrf.mxu0
  %v2103 = vpop.f32.mrf.mxu0
  %v2104 = vadd.f32 %v1868, %v2103
  %v2105 = vpop.f32.mrf.mxu0
  %2106 = vmatprep.mubr.bf16.mxu0 0
  %2107 = vmatmul.mubr.bf16.gmra.mxu0 %v1919
  %v2108 = vpop.f32.mrf.mxu0
  %v2109 = vadd.f32 %v1868, %v2108
  %v2110 = vpop.f32.mrf.mxu0
  %v2111 = vpop.f32.mrf.mxu0
  %v2112 = vadd.f32 %v1868, %v2111
  %v2113 = vpop.f32.mrf.mxu0
  %2114 = vmatprep.mubr.bf16.mxu0 0
  %2115 = vmatmul.mubr.bf16.gmra.mxu0 %v1922
  %v2116 = vpop.f32.mrf.mxu0
  %v2117 = vadd.f32 %v1868, %v2116
  %v2118 = vpop.f32.mrf.mxu0
  %v2119 = vpop.f32.mrf.mxu0
  %v2120 = vadd.f32 %v1868, %v2119
  %v2121 = vpop.f32.mrf.mxu0
  %2122 = vmatprep.mubr.bf16.mxu0 0
  %2123 = vmatmul.mubr.bf16.gmra.mxu0 %v1925
  %v2124 = vpop.f32.mrf.mxu0
  %v2125 = vadd.f32 %v1868, %v2124
  %v2126 = vpop.f32.mrf.mxu0
  %v2127 = vpop.f32.mrf.mxu0
  %v2128 = vadd.f32 %v1868, %v2127
  %v2129 = vpop.f32.mrf.mxu0
  %2130 = vmatprep.mubr.bf16.mxu0 0
  %2131 = vmatmul.mubr.bf16.gmra.mxu0 %v1928
  %v2132 = vpop.f32.mrf.mxu0
  %v2133 = vadd.f32 %v1868, %v2132
  %v2134 = vpop.f32.mrf.mxu0
  %v2135 = vpop.f32.mrf.mxu0
  %v2136 = vadd.f32 %v1868, %v2135
  %v2137 = vpop.f32.mrf.mxu0
  %2138 = vmatprep.mubr.bf16.mxu0 0
  %2139 = vmatmul.mubr.bf16.gmra.mxu0 %v1931
  %v2140 = vpop.f32.mrf.mxu0
  %v2141 = vadd.f32 %v1868, %v2140
  %v2142 = vpop.f32.mrf.mxu0
  %v2143 = vpop.f32.mrf.mxu0
  %v2144 = vadd.f32 %v1868, %v2143
  %v2145 = vpop.f32.mrf.mxu0
  %2146 = vmatprep.mubr.bf16.mxu0 0
  %2147 = vmatmul.mubr.bf16.gmra.mxu0 %v1934
  %v2148 = vpop.f32.mrf.mxu0
  %v2149 = vadd.f32 %v1868, %v2148
  %v2150 = vpop.f32.mrf.mxu0
  %v2151 = vpop.f32.mrf.mxu0
  %v2152 = vadd.f32 %v1868, %v2151
  %v2153 = vpop.f32.mrf.mxu0
  %2154 = vmatprep.mubr.bf16.mxu0 0
  %2155 = vmatmul.mubr.bf16.gmra.mxu0 %v1937
  %v2156 = vpop.f32.mrf.mxu0
  %v2157 = vadd.f32 %v1868, %v2156
  %v2158 = vpop.f32.mrf.mxu0
  %v2159 = vpop.f32.mrf.mxu0
  %v2160 = vadd.f32 %v1868, %v2159
  %v2161 = vpop.f32.mrf.mxu0
  %2162 = vmatprep.mubr.bf16.mxu0 0
  %2163 = vmatmul.mubr.bf16.gmra.mxu0 %v1940
  %v2164 = vpop.f32.mrf.mxu0
  %v2165 = vadd.f32 %v1868, %v2164
  %v2166 = vpop.f32.mrf.mxu0
  %v2167 = vpop.f32.mrf.mxu0
  %v2168 = vadd.f32 %v1868, %v2167
  %v2169 = vpop.f32.mrf.mxu0
  %2170 = vmatprep.mubr.bf16.mxu0 0
  %2171 = vmatmul.mubr.bf16.gmra.mxu0 %v1943
  %v2172 = vpop.f32.mrf.mxu0
  %v2173 = vadd.f32 %v1868, %v2172
  %v2174 = vpop.f32.mrf.mxu0
  %v2175 = vpop.f32.mrf.mxu0
  %v2176 = vadd.f32 %v1868, %v2175
  %v2177 = vpop.f32.mrf.mxu0
  %2178 = vmatprep.mubr.bf16.mxu0 0
  %2179 = vmatmul.mubr.bf16.gmra.mxu0 %v1946
  %v2180 = vpop.f32.mrf.mxu0
  %v2181 = vadd.f32 %v1868, %v2180
  %v2182 = vpop.f32.mrf.mxu0
  %v2183 = vpop.f32.mrf.mxu0
  %v2184 = vadd.f32 %v1868, %v2183
  %v2185 = vpop.f32.mrf.mxu0
  %2186 = vmatprep.mubr.bf16.mxu0 0
  %2187 = vmatmul.mubr.bf16.gmra.mxu0 %v1949
  %v2188 = vpop.f32.mrf.mxu0
  %v2189 = vadd.f32 %v1868, %v2188
  %v2190 = vpop.f32.mrf.mxu0
  %v2191 = vpop.f32.mrf.mxu0
  %v2192 = vadd.f32 %v1868, %v2191
  %v2193 = vpop.f32.mrf.mxu0
  %2194 = vmatprep.mubr.bf16.mxu0 0
  %2195 = vmatmul.mubr.bf16.gmra.mxu0 %v1952
  %v2196 = vpop.f32.mrf.mxu0
  %v2197 = vadd.f32 %v1868, %v2196
  %v2198 = vpop.f32.mrf.mxu0
  %v2199 = vpop.f32.mrf.mxu0
  %v2200 = vadd.f32 %v1868, %v2199
  %v2201 = vpop.f32.mrf.mxu0
  %2202 = vmatprep.mubr.bf16.mxu0 0
  %2203 = vmatmul.mubr.bf16.gmra.mxu0 %v1955
  %v2204 = vpop.f32.mrf.mxu0
  %v2205 = vadd.f32 %v1868, %v2204
  %v2206 = vpop.f32.mrf.mxu0
  %v2207 = vpop.f32.mrf.mxu0
  %v2208 = vadd.f32 %v1868, %v2207
  %v2209 = vpop.f32.mrf.mxu0
  %2210 = vmatprep.mubr.bf16.mxu0 0
  %2211 = vmatmul.mubr.bf16.gmra.mxu0 %v1958
  %v2212 = vpop.f32.mrf.mxu0
  %v2213 = vadd.f32 %v1868, %v2212
  %v2214 = vpop.f32.mrf.mxu0
  %v2215 = vpop.f32.mrf.mxu0
  %v2216 = vadd.f32 %v1868, %v2215
  %v2217 = vpop.f32.mrf.mxu0
  %2218 = vmatprep.mubr.bf16.mxu0 0
  %2219 = vmatmul.mubr.bf16.gmra.mxu0 %v1961
  %v2220 = vpop.f32.mrf.mxu0
  %v2221 = vadd.f32 %v1868, %v2220
  %v2222 = vpop.f32.mrf.mxu0
  %v2223 = vpop.f32.mrf.mxu0
  %v2224 = vadd.f32 %v1868, %v2223
  %v2225 = vpop.f32.mrf.mxu0
  %2226 = vmatprep.mubr.bf16.mxu0 0
  %2227 = vmatmul.mubr.bf16.gmra.mxu0 %v1964
  %v2228 = vpop.f32.mrf.mxu0
  %v2229 = vadd.f32 %v1868, %v2228
  %v2230 = vpop.f32.mrf.mxu0
  %v2231 = vpop.f32.mrf.mxu0
  %v2232 = vadd.f32 %v1868, %v2231
  %v2233 = vpop.f32.mrf.mxu0
  %2234 = vmatprep.mubr.bf16.mxu0 0
  %2235 = vmatmul.mubr.bf16.gmra.mxu0 %v1967
  %v2236 = vpop.f32.mrf.mxu0
  %v2237 = vadd.f32 %v1868, %v2236
  %v2238 = vpop.f32.mrf.mxu0
  %v2239 = vpop.f32.mrf.mxu0
  %v2240 = vadd.f32 %v1868, %v2239
  %v2241 = vpop.f32.mrf.mxu0
  %2242 = vmatprep.mubr.bf16.mxu0 0
  %2243 = vmatmul.mubr.bf16.gmra.mxu0 %v1970
  %v2244 = vpop.f32.mrf.mxu0
  %v2245 = vadd.f32 %v1868, %v2244
  %v2246 = vpop.f32.mrf.mxu0
  %v2247 = vpop.f32.mrf.mxu0
  %v2248 = vadd.f32 %v1868, %v2247
  %v2249 = vpop.f32.mrf.mxu0
  %2250 = vmatprep.mubr.bf16.mxu0 0
  %2251 = vmatmul.mubr.bf16.gmra.mxu0 %v1973
  %v2252 = vpop.f32.mrf.mxu0
  %v2253 = vadd.f32 %v1868, %v2252
  %v2254 = vpop.f32.mrf.mxu0
  %v2255 = vpop.f32.mrf.mxu0
  %v2256 = vadd.f32 %v1868, %v2255
  %v2257 = vpop.f32.mrf.mxu0
  %2258 = vmatprep.mubr.bf16.mxu0 0
  %2259 = vmatmul.mubr.bf16.gmra.mxu0 %v1976
  %v2260 = vpop.f32.mrf.mxu0
  %v2261 = vadd.f32 %v1868, %v2260
  %v2262 = vpop.f32.mrf.mxu0
  %v2263 = vpop.f32.mrf.mxu0
  %v2264 = vadd.f32 %v1868, %v2263
  %v2265 = vpop.f32.mrf.mxu0
  %2266 = vdwg.mxu0
  %v2267 = vmax.f32 %v2013, 0.0
  %v2268 = vmax.f32 %v2016, 0.0
  %v2269 = vmax.f32 %v2021, 0.0
  %v2270 = vmax.f32 %v2024, 0.0
  %v2271 = vmax.f32 %v2029, 0.0
  %v2272 = vmax.f32 %v2032, 0.0
  %v2273 = vmax.f32 %v2037, 0.0
  %v2274 = vmax.f32 %v2040, 0.0
  %v2275 = vmax.f32 %v2045, 0.0
  %v2276 = vmax.f32 %v2048, 0.0
  %v2277 = vmax.f32 %v2053, 0.0
  %v2278 = vmax.f32 %v2056, 0.0
  %v2279 = vmax.f32 %v2061, 0.0
  %v2280 = vmax.f32 %v2064, 0.0
  %v2281 = vmax.f32 %v2069, 0.0
  %v2282 = vmax.f32 %v2072, 0.0
  %v2283 = vmax.f32 %v2077, 0.0
  %v2284 = vmax.f32 %v2080, 0.0
  %v2285 = vmax.f32 %v2085, 0.0
  %v2286 = vmax.f32 %v2088, 0.0
  %v2287 = vmax.f32 %v2093, 0.0
  %v2288 = vmax.f32 %v2096, 0.0
  %v2289 = vmax.f32 %v2101, 0.0
  %v2290 = vmax.f32 %v2104, 0.0
  %v2291 = vmax.f32 %v2109, 0.0
  %v2292 = vmax.f32 %v2112, 0.0
  %v2293 = vmax.f32 %v2117, 0.0
  %v2294 = vmax.f32 %v2120, 0.0
  %v2295 = vmax.f32 %v2125, 0.0
  %v2296 = vmax.f32 %v2128, 0.0
  %v2297 = vmax.f32 %v2133, 0.0
  %v2298 = vmax.f32 %v2136, 0.0
  %v2299 = vmax.f32 %v2141, 0.0
  %v2300 = vmax.f32 %v2144, 0.0
  %v2301 = vmax.f32 %v2149, 0.0
  %v2302 = vmax.f32 %v2152, 0.0
  %v2303 = vmax.f32 %v2157, 0.0
  %v2304 = vmax.f32 %v2160, 0.0
  %v2305 = vmax.f32 %v2165, 0.0
  %v2306 = vmax.f32 %v2168, 0.0
  %v2307 = vmax.f32 %v2173, 0.0
  %v2308 = vmax.f32 %v2176, 0.0
  %v2309 = vmax.f32 %v2181, 0.0
  %v2310 = vmax.f32 %v2184, 0.0
  %v2311 = vmax.f32 %v2189, 0.0
  %v2312 = vmax.f32 %v2192, 0.0
  %v2313 = vmax.f32 %v2197, 0.0
  %v2314 = vmax.f32 %v2200, 0.0
  %v2315 = vmax.f32 %v2205, 0.0
  %v2316 = vmax.f32 %v2208, 0.0
  %v2317 = vmax.f32 %v2213, 0.0
  %v2318 = vmax.f32 %v2216, 0.0
  %v2319 = vmax.f32 %v2221, 0.0
  %v2320 = vmax.f32 %v2224, 0.0
  %v2321 = vmax.f32 %v2229, 0.0
  %v2322 = vmax.f32 %v2232, 0.0
  %v2323 = vmax.f32 %v2237, 0.0
  %v2324 = vmax.f32 %v2240, 0.0
  %v2325 = vmax.f32 %v2245, 0.0
  %v2326 = vmax.f32 %v2248, 0.0
  %v2327 = vmax.f32 %v2253, 0.0
  %v2328 = vmax.f32 %v2256, 0.0
  %v2329 = vmax.f32 %v2261, 0.0
  %v2330 = vmax.f32 %v2264, 0.0
  %2331 = vst.msk [vmem:[%s9] sm:$0xff] %vm797, %v2267
  %2332 = vst.msk [vmem:[%s9 + $0x8] sm:$0xff] %vm797, %v2268
  %2333 = vst.msk [vmem:[%s9 + $0x10] sm:$0xff] %vm797, %v2269
  %2334 = vst.msk [vmem:[%s9 + $0x18] sm:$0xff] %vm797, %v2270
  %2335 = vst.msk [vmem:[%s9 + $0x20] sm:$0xff] %vm797, %v2271
  %2336 = vst.msk [vmem:[%s9 + $0x28] sm:$0xff] %vm797, %v2272
  %2337 = vst.msk [vmem:[%s9 + $0x30] sm:$0xff] %vm797, %v2273
  %2338 = vst.msk [vmem:[%s9 + $0x38] sm:$0xff] %vm797, %v2274
  %2339 = vst.msk [vmem:[%s9 + $0x40] sm:$0xff] %vm797, %v2275
  %2340 = vst.msk [vmem:[%s9 + $0x48] sm:$0xff] %vm797, %v2276
  %2341 = vst.msk [vmem:[%s9 + $0x50] sm:$0xff] %vm797, %v2277
  %2342 = vst.msk [vmem:[%s9 + $0x58] sm:$0xff] %vm797, %v2278
  %2343 = vst.msk [vmem:[%s9 + $0x60] sm:$0xff] %vm797, %v2279
  %2344 = vst.msk [vmem:[%s9 + $0x68] sm:$0xff] %vm797, %v2280
  %2345 = vst.msk [vmem:[%s9 + $0x70] sm:$0xff] %vm797, %v2281
  %2346 = vst.msk [vmem:[%s9 + $0x78] sm:$0xff] %vm797, %v2282
  %2347 = vst.msk [vmem:[%s9 + $0x80] sm:$0xff] %vm797, %v2283
  %2348 = vst.msk [vmem:[%s9 + $0x88] sm:$0xff] %vm797, %v2284
  %2349 = vst.msk [vmem:[%s9 + $0x90] sm:$0xff] %vm797, %v2285
  %2350 = vst.msk [vmem:[%s9 + $0x98] sm:$0xff] %vm797, %v2286
  %2351 = vst.msk [vmem:[%s9 + $0xa0] sm:$0xff] %vm797, %v2287
  %2352 = vst.msk [vmem:[%s9 + $0xa8] sm:$0xff] %vm797, %v2288
  %2353 = vst.msk [vmem:[%s9 + $0xb0] sm:$0xff] %vm797, %v2289
  %2354 = vst.msk [vmem:[%s9 + $0xb8] sm:$0xff] %vm797, %v2290
  %2355 = vst.msk [vmem:[%s9 + $0xc0] sm:$0xff] %vm797, %v2291
  %2356 = vst.msk [vmem:[%s9 + $0xc8] sm:$0xff] %vm797, %v2292
  %2357 = vst.msk [vmem:[%s9 + $0xd0] sm:$0xff] %vm797, %v2293
  %2358 = vst.msk [vmem:[%s9 + $0xd8] sm:$0xff] %vm797, %v2294
  %2359 = vst.msk [vmem:[%s9 + $0xe0] sm:$0xff] %vm797, %v2295
  %2360 = vst.msk [vmem:[%s9 + $0xe8] sm:$0xff] %vm797, %v2296
  %2361 = vst.msk [vmem:[%s9 + $0xf0] sm:$0xff] %vm797, %v2297
  %2362 = vst.msk [vmem:[%s9 + $0xf8] sm:$0xff] %vm797, %v2298
  %2363 = vst.msk [vmem:[%s9 + $0x100] sm:$0xff] %vm797, %v2299
  %2364 = vst.msk [vmem:[%s9 + $0x108] sm:$0xff] %vm797, %v2300
  %2365 = vst.msk [vmem:[%s9 + $0x110] sm:$0xff] %vm797, %v2301
  %2366 = vst.msk [vmem:[%s9 + $0x118] sm:$0xff] %vm797, %v2302
  %2367 = vst.msk [vmem:[%s9 + $0x120] sm:$0xff] %vm797, %v2303
  %2368 = vst.msk [vmem:[%s9 + $0x128] sm:$0xff] %vm797, %v2304
  %2369 = vst.msk [vmem:[%s9 + $0x130] sm:$0xff] %vm797, %v2305
  %2370 = vst.msk [vmem:[%s9 + $0x138] sm:$0xff] %vm797, %v2306
  %2371 = vst.msk [vmem:[%s9 + $0x140] sm:$0xff] %vm797, %v2307
  %2372 = vst.msk [vmem:[%s9 + $0x148] sm:$0xff] %vm797, %v2308
  %2373 = vst.msk [vmem:[%s9 + $0x150] sm:$0xff] %vm797, %v2309
  %2374 = vst.msk [vmem:[%s9 + $0x158] sm:$0xff] %vm797, %v2310
  %2375 = vst.msk [vmem:[%s9 + $0x160] sm:$0xff] %vm797, %v2311
  %2376 = vst.msk [vmem:[%s9 + $0x168] sm:$0xff] %vm797, %v2312
  %2377 = vst.msk [vmem:[%s9 + $0x170] sm:$0xff] %vm797, %v2313
  %2378 = vst.msk [vmem:[%s9 + $0x178] sm:$0xff] %vm797, %v2314
  %2379 = vst.msk [vmem:[%s9 + $0x180] sm:$0xff] %vm797, %v2315
  %2380 = vst.msk [vmem:[%s9 + $0x188] sm:$0xff] %vm797, %v2316
  %2381 = vst.msk [vmem:[%s9 + $0x190] sm:$0xff] %vm797, %v2317
  %2382 = vst.msk [vmem:[%s9 + $0x198] sm:$0xff] %vm797, %v2318
  %2383 = vst.msk [vmem:[%s9 + $0x1a0] sm:$0xff] %vm797, %v2319
  %2384 = vst.msk [vmem:[%s9 + $0x1a8] sm:$0xff] %vm797, %v2320
  %2385 = vst.msk [vmem:[%s9 + $0x1b0] sm:$0xff] %vm797, %v2321
  %2386 = vst.msk [vmem:[%s9 + $0x1b8] sm:$0xff] %vm797, %v2322
  %2387 = vst.msk [vmem:[%s9 + $0x1c0] sm:$0xff] %vm797, %v2323
  %2388 = vst.msk [vmem:[%s9 + $0x1c8] sm:$0xff] %vm797, %v2324
  %2389 = vst.msk [vmem:[%s9 + $0x1d0] sm:$0xff] %vm797, %v2325
  %2390 = vst.msk [vmem:[%s9 + $0x1d8] sm:$0xff] %vm797, %v2326
  %2391 = vst.msk [vmem:[%s9 + $0x1e0] sm:$0xff] %vm797, %v2327
  %2392 = vst.msk [vmem:[%s9 + $0x1e8] sm:$0xff] %vm797, %v2328
  %2393 = vst.msk [vmem:[%s9 + $0x1f0] sm:$0xff] %vm797, %v2329
  %2394 = vst.msk [vmem:[%s9 + $0x1f8] sm:$0xff] %vm797, %v2330
  // Predicated region
  $region38: #{tpu_custom_call.1} parent=0 // pred_check
    _
  $region39: #{tpu_custom_call.1} parent=0 // pred_check_branch
    %2396 = sbr.rel (0) target = $region41
  $region40: #{tpu_custom_call.1} parent=0 // pred_region
    _
  $region41: #{tpu_custom_call.1} parent=0 // pred_fallthru
    _
  // Predicated region
  $region42: #{tpu_custom_call.1} parent=0 // pred_check
    _
  $region43: #{tpu_custom_call.1} parent=0 // pred_check_branch
    %2398 = sbr.rel (0) target = $region45
  $region44: #{tpu_custom_call.1} parent=0 // pred_region
    _
  $region45: #{tpu_custom_call.1} parent=0 // pred_fallthru
    _

</llo_original>
